<compile_context>
chip_gen: v7x
topology: tpu7x:2x2x1
jax: 0.10.0
libtpu: 0.0.40
codegen_flags: <defaults>
</compile_context>

<pallas_src>
import functools

import jax
import jax.numpy as jnp
from jax.experimental import pallas as pl
from jax.experimental.pallas import tpu as pltpu

EPS = 1e-5

# Model hyper-params (the module's forward does x.view(B, -1)).
BATCH = 2
CHANNELS = 4
HEIGHT = 16
WIDTH = 16
INPUT_SIZE = CHANNELS * HEIGHT * WIDTH          # 1024
LIN1, LIN2, LIN3 = 256, 256, 256
OUTPUT_SIZE = 10
OUT_PAD = 128                                   # lane-dense padded output width
assert LIN1 == LIN2 == LIN3                     # one row-mask serves all layers


def mlp_kernel(x_ref, w1_ref, w2_ref, w3_ref, w4_ref, vec_ref, out_ref,
               *, real_batch):
    """Fused forward pass; the whole (small) MLP lives in VMEM.

    vec_ref packs the per-feature vectors:
      row 0: gamma1   row 1: beta1
      row 2: gamma2   row 3: beta2
      row 4: gamma3   row 5: beta3
      row 6, lanes [0:OUT_PAD): final bias b4 (zero past class 10)
    """
    m_pad = x_ref.shape[0]
    inv_b = jnp.float32(1.0 / real_batch)

    if m_pad > real_batch:
        rows = jax.lax.broadcasted_iota(jnp.int32, (m_pad, LIN1), 0)
        mask = rows < real_batch            # True on real rows, False on padding
    else:
        mask = None

    def keep_real_rows(v):
        return v if mask is None else jnp.where(mask, v, 0.0)

    def lin_bn_relu(h, w_ref, gamma, beta):
        # Linear (bias folded away: cancelled exactly by the BN mean subtraction).
        z = jnp.dot(h, w_ref[...].astype(jnp.float32),
                    preferred_element_type=jnp.float32)
        # Padded rows of h are exactly zero (and there is no bias), so the sum
        # over all m_pad rows equals the sum over the real batch rows.
        mu = jnp.sum(z, axis=0, keepdims=True) * inv_b
        zc = keep_real_rows(z - mu)
        var = jnp.sum(zc * zc, axis=0, keepdims=True) * inv_b    # biased var
        s = gamma * jax.lax.rsqrt(var + EPS)                     # folded BN scale
        return keep_real_rows(jnp.maximum(zc * s + beta, 0.0))

    h = x_ref[...]
    h = lin_bn_relu(h, w1_ref, vec_ref[0:1, :], vec_ref[1:2, :])
    h = lin_bn_relu(h, w2_ref, vec_ref[2:3, :], vec_ref[3:4, :])
    h = lin_bn_relu(h, w3_ref, vec_ref[4:5, :], vec_ref[5:6, :])
    out = jnp.dot(h, w4_ref[...].astype(jnp.float32),
                  preferred_element_type=jnp.float32)
    out_ref[...] = out + vec_ref[6:7, :OUT_PAD]


def init_params(key):
    """PyTorch-style parameters.

    Linear weights are stored transposed relative to torch (i.e. (in, out)) and
    rounded to bfloat16 values (the dtype the kernel streams from HBM).
    """
    sizes = [(INPUT_SIZE, LIN1), (LIN1, LIN2), (LIN2, LIN3), (LIN3, OUTPUT_SIZE)]
    p = {}
    for li, (fan_in, fan_out) in enumerate(sizes, start=1):
        key, kw, kb = jax.random.split(key, 3)
        bound = 1.0 / (fan_in ** 0.5)
        w = jax.random.uniform(kw, (fan_in, fan_out), jnp.float32, -bound, bound)
        p[f"w{li}"] = w.astype(jnp.bfloat16).astype(jnp.float32)
        p[f"b{li}"] = jax.random.uniform(kb, (fan_out,), jnp.float32, -bound, bound)
        if li <= 3:   # hidden layers have BatchNorm1d affine params
            p[f"g{li}"] = jnp.ones((fan_out,), jnp.float32)
            p[f"be{li}"] = jnp.zeros((fan_out,), jnp.float32)
    return p


def pack_kernel_params(p):
    """bf16 weights + one packed (8, LIN1) f32 vector array for the kernel."""
    w1 = p["w1"].astype(jnp.bfloat16)
    w2 = p["w2"].astype(jnp.bfloat16)
    w3 = p["w3"].astype(jnp.bfloat16)
    w4 = jnp.zeros((LIN3, OUT_PAD), jnp.bfloat16)
    w4 = w4.at[:, :OUTPUT_SIZE].set(p["w4"].astype(jnp.bfloat16))
    vec = jnp.zeros((8, LIN1), jnp.float32)
    vec = vec.at[0].set(p["g1"]).at[1].set(p["be1"])
    vec = vec.at[2].set(p["g2"]).at[3].set(p["be2"])
    vec = vec.at[4].set(p["g3"]).at[5].set(p["be3"])
    vec = vec.at[6, :OUTPUT_SIZE].set(p["b4"])
    # b1..b3 are intentionally NOT passed: a Linear bias feeding a
    # training-mode BatchNorm is cancelled exactly by the mean subtraction.
    return w1, w2, w3, w4, vec


@jax.jit
def simple_dense_net_forward(x_nchw, params):
    batch = x_nchw.shape[0]
    m_pad = max(8, ((batch + 7) // 8) * 8)       # pad rows to the f32 sublane
    x2d = x_nchw.reshape(batch, -1).astype(jnp.float32)     # x.view(B, -1)
    if m_pad != batch:
        x2d = jnp.pad(x2d, ((0, m_pad - batch), (0, 0)))

    w1, w2, w3, w4, vec = pack_kernel_params(params)
    vmem = pl.BlockSpec(memory_space=pltpu.MemorySpace.VMEM)
    kernel = functools.partial(mlp_kernel, real_batch=batch)
    # Note: training-mode BN couples all batch rows, so the full (padded) batch
    # is kept resident in VMEM and no batch grid is used. For huge batches this
    # would need a two-pass (stats, then normalize) batch-tiled variant.
    out_padded = pl.pallas_call(
        kernel,
        out_shape=jax.ShapeDtypeStruct((m_pad, OUT_PAD), jnp.float32),
        in_specs=[vmem] * 6,
        out_specs=vmem,
    )(x2d, w1, w2, w3, w4, vec)
    return out_padded[:batch, :OUTPUT_SIZE]


def reference_forward(x_nchw, p):
    """Pure-JAX reference with the exact PyTorch layer structure
    (Linear biases included, standard centered BatchNorm formula)."""
    h = x_nchw.reshape(x_nchw.shape[0], -1).astype(jnp.float32)

    def block(h, w, b, g, be):
        z = h @ w + b
        mu = jnp.mean(z, axis=0, keepdims=True)
        var = jnp.mean((z - mu) ** 2, axis=0, keepdims=True)
        zn = (z - mu) / jnp.sqrt(var + EPS) * g + be
        return jnp.maximum(zn, 0.0)

    h = block(h, p["w1"], p["b1"], p["g1"], p["be1"])
    h = block(h, p["w2"], p["b2"], p["g2"], p["be2"])
    h = block(h, p["w3"], p["b3"], p["g3"], p["be3"])
    return h @ p["w4"] + p["b4"]


if __name__ == "__main__":
    key = jax.random.PRNGKey(0)
    key_x, key_p = jax.random.split(key)
    x = jax.random.normal(key_x, (BATCH, CHANNELS, WIDTH, HEIGHT), jnp.float32)
    params = init_params(key_p)

    out = simple_dense_net_forward(x, params)
    out = jax.block_until_ready(out)

    ref = reference_forward(x, params)
    assert out.shape == (BATCH, OUTPUT_SIZE), out.shape
    max_diff = jnp.max(jnp.abs(out - ref))
    assert jnp.allclose(out, ref, atol=1e-3, rtol=1e-3), (
        f"mismatch vs reference: max abs diff {max_diff}")
    print("KERNEL_OK")
</pallas_src>

<mosaic_0001>
module attributes {stable_mosaic.version = 11 : i64} {
  func.func @mlp_kernel(%arg0: memref<8x1024xf32, #tpu.memory_space<vmem>>, %arg1: memref<1024x256xbf16, #tpu.memory_space<vmem>>, %arg2: memref<256x256xbf16, #tpu.memory_space<vmem>>, %arg3: memref<256x256xbf16, #tpu.memory_space<vmem>>, %arg4: memref<256x128xbf16, #tpu.memory_space<vmem>>, %arg5: memref<8x256xf32, #tpu.memory_space<vmem>>, %arg6: memref<8x128xf32, #tpu.memory_space<vmem>>) attributes {dimension_semantics = [], scalar_prefetch = 0 : i64, scratch_operands = 0 : i64, tpu.core_type = #tpu.core_type<tc>} {
    %0 = tpu.iota {dimensions = array<i32: 0>} : vector<8x256xi32>
    %c2_i32 = arith.constant 2 : i32
    %1 = vector.broadcast %c2_i32 : i32 to vector<8x256xi32>
    %2 = arith.cmpi slt, %0, %1 : vector<8x256xi32>
    %c0 = arith.constant 0 : index
    %c0_0 = arith.constant 0 : index
    %3 = vector.load %arg0[%c0, %c0_0] : memref<8x1024xf32, #tpu.memory_space<vmem>>, vector<8x1024xf32>
    %c0_1 = arith.constant 0 : index
    %c0_2 = arith.constant 0 : index
    %4 = vector.load %arg5[%c0_1, %c0_2] : memref<8x256xf32, #tpu.memory_space<vmem>>, vector<1x256xf32>
    %c1 = arith.constant 1 : index
    %c0_3 = arith.constant 0 : index
    %5 = vector.load %arg5[%c1, %c0_3] : memref<8x256xf32, #tpu.memory_space<vmem>>, vector<1x256xf32>
    %c0_4 = arith.constant 0 : index
    %c0_5 = arith.constant 0 : index
    %6 = vector.load %arg1[%c0_4, %c0_5] : memref<1024x256xbf16, #tpu.memory_space<vmem>>, vector<1024x256xbf16>
    %7 = arith.extf %6 : vector<1024x256xbf16> to vector<1024x256xf32>
    %cst = arith.constant dense<0.000000e+00> : vector<8x256xf32>
    %8 = tpu.matmul %3, %7, %cst {dimension_numbers = #tpu.dot_dimension_numbers<[1], [0], [0], [1], [0, 0, 1, 1], [], []>} : vector<8x1024xf32>, vector<1024x256xf32>, vector<8x256xf32> -> vector<8x256xf32>
    %cst_6 = arith.constant dense<0.000000e+00> : vector<256xf32>
    %9 = vector.multi_reduction <add>, %8, %cst_6 [0] : vector<8x256xf32> to vector<256xf32>
    %10 = vector.shape_cast %9 : vector<256xf32> to vector<1x256xf32>
    %cst_7 = arith.constant 5.000000e-01 : f32
    %11 = vector.broadcast %cst_7 : f32 to vector<1x256xf32>
    %12 = arith.mulf %10, %11 : vector<1x256xf32>
    %13 = vector.broadcast %12 : vector<1x256xf32> to vector<8x256xf32>
    %14 = arith.subf %8, %13 : vector<8x256xf32>
    %cst_8 = arith.constant 0.000000e+00 : f32
    %15 = vector.broadcast %cst_8 : f32 to vector<8x256xf32>
    %16 = arith.select %2, %14, %15 : vector<8x256xi1>, vector<8x256xf32>
    %17 = arith.mulf %16, %16 : vector<8x256xf32>
    %cst_9 = arith.constant dense<0.000000e+00> : vector<256xf32>
    %18 = vector.multi_reduction <add>, %17, %cst_9 [0] : vector<8x256xf32> to vector<256xf32>
    %19 = vector.shape_cast %18 : vector<256xf32> to vector<1x256xf32>
    %cst_10 = arith.constant 5.000000e-01 : f32
    %20 = vector.broadcast %cst_10 : f32 to vector<1x256xf32>
    %21 = arith.mulf %19, %20 : vector<1x256xf32>
    %cst_11 = arith.constant 9.99999974E-6 : f32
    %22 = vector.broadcast %cst_11 : f32 to vector<1x256xf32>
    %23 = arith.addf %21, %22 : vector<1x256xf32>
    %24 = math.rsqrt %23 : vector<1x256xf32>
    %25 = arith.mulf %4, %24 : vector<1x256xf32>
    %26 = vector.broadcast %25 : vector<1x256xf32> to vector<8x256xf32>
    %27 = arith.mulf %16, %26 : vector<8x256xf32>
    %28 = vector.broadcast %5 : vector<1x256xf32> to vector<8x256xf32>
    %29 = arith.addf %27, %28 : vector<8x256xf32>
    %cst_12 = arith.constant 0.000000e+00 : f32
    %30 = vector.broadcast %cst_12 : f32 to vector<8x256xf32>
    %31 = arith.maximumf %29, %30 : vector<8x256xf32>
    %cst_13 = arith.constant 0.000000e+00 : f32
    %32 = vector.broadcast %cst_13 : f32 to vector<8x256xf32>
    %33 = arith.select %2, %31, %32 : vector<8x256xi1>, vector<8x256xf32>
    %c2 = arith.constant 2 : index
    %c0_14 = arith.constant 0 : index
    %34 = vector.load %arg5[%c2, %c0_14] : memref<8x256xf32, #tpu.memory_space<vmem>>, vector<1x256xf32>
    %c3 = arith.constant 3 : index
    %c0_15 = arith.constant 0 : index
    %35 = vector.load %arg5[%c3, %c0_15] : memref<8x256xf32, #tpu.memory_space<vmem>>, vector<1x256xf32>
    %c0_16 = arith.constant 0 : index
    %c0_17 = arith.constant 0 : index
    %36 = vector.load %arg2[%c0_16, %c0_17] : memref<256x256xbf16, #tpu.memory_space<vmem>>, vector<256x256xbf16>
    %37 = arith.extf %36 : vector<256x256xbf16> to vector<256x256xf32>
    %cst_18 = arith.constant dense<0.000000e+00> : vector<8x256xf32>
    %38 = tpu.matmul %33, %37, %cst_18 {dimension_numbers = #tpu.dot_dimension_numbers<[1], [0], [0], [1], [0, 0, 1, 1], [], []>} : vector<8x256xf32>, vector<256x256xf32>, vector<8x256xf32> -> vector<8x256xf32>
    %cst_19 = arith.constant dense<0.000000e+00> : vector<256xf32>
    %39 = vector.multi_reduction <add>, %38, %cst_19 [0] : vector<8x256xf32> to vector<256xf32>
    %40 = vector.shape_cast %39 : vector<256xf32> to vector<1x256xf32>
    %cst_20 = arith.constant 5.000000e-01 : f32
    %41 = vector.broadcast %cst_20 : f32 to vector<1x256xf32>
    %42 = arith.mulf %40, %41 : vector<1x256xf32>
    %43 = vector.broadcast %42 : vector<1x256xf32> to vector<8x256xf32>
    %44 = arith.subf %38, %43 : vector<8x256xf32>
    %cst_21 = arith.constant 0.000000e+00 : f32
    %45 = vector.broadcast %cst_21 : f32 to vector<8x256xf32>
    %46 = arith.select %2, %44, %45 : vector<8x256xi1>, vector<8x256xf32>
    %47 = arith.mulf %46, %46 : vector<8x256xf32>
    %cst_22 = arith.constant dense<0.000000e+00> : vector<256xf32>
    %48 = vector.multi_reduction <add>, %47, %cst_22 [0] : vector<8x256xf32> to vector<256xf32>
    %49 = vector.shape_cast %48 : vector<256xf32> to vector<1x256xf32>
    %cst_23 = arith.constant 5.000000e-01 : f32
    %50 = vector.broadcast %cst_23 : f32 to vector<1x256xf32>
    %51 = arith.mulf %49, %50 : vector<1x256xf32>
    %cst_24 = arith.constant 9.99999974E-6 : f32
    %52 = vector.broadcast %cst_24 : f32 to vector<1x256xf32>
    %53 = arith.addf %51, %52 : vector<1x256xf32>
    %54 = math.rsqrt %53 : vector<1x256xf32>
    %55 = arith.mulf %34, %54 : vector<1x256xf32>
    %56 = vector.broadcast %55 : vector<1x256xf32> to vector<8x256xf32>
    %57 = arith.mulf %46, %56 : vector<8x256xf32>
    %58 = vector.broadcast %35 : vector<1x256xf32> to vector<8x256xf32>
    %59 = arith.addf %57, %58 : vector<8x256xf32>
    %cst_25 = arith.constant 0.000000e+00 : f32
    %60 = vector.broadcast %cst_25 : f32 to vector<8x256xf32>
    %61 = arith.maximumf %59, %60 : vector<8x256xf32>
    %cst_26 = arith.constant 0.000000e+00 : f32
    %62 = vector.broadcast %cst_26 : f32 to vector<8x256xf32>
    %63 = arith.select %2, %61, %62 : vector<8x256xi1>, vector<8x256xf32>
    %c4 = arith.constant 4 : index
    %c0_27 = arith.constant 0 : index
    %64 = vector.load %arg5[%c4, %c0_27] : memref<8x256xf32, #tpu.memory_space<vmem>>, vector<1x256xf32>
    %c5 = arith.constant 5 : index
    %c0_28 = arith.constant 0 : index
    %65 = vector.load %arg5[%c5, %c0_28] : memref<8x256xf32, #tpu.memory_space<vmem>>, vector<1x256xf32>
    %c0_29 = arith.constant 0 : index
    %c0_30 = arith.constant 0 : index
    %66 = vector.load %arg3[%c0_29, %c0_30] : memref<256x256xbf16, #tpu.memory_space<vmem>>, vector<256x256xbf16>
    %67 = arith.extf %66 : vector<256x256xbf16> to vector<256x256xf32>
    %cst_31 = arith.constant dense<0.000000e+00> : vector<8x256xf32>
    %68 = tpu.matmul %63, %67, %cst_31 {dimension_numbers = #tpu.dot_dimension_numbers<[1], [0], [0], [1], [0, 0, 1, 1], [], []>} : vector<8x256xf32>, vector<256x256xf32>, vector<8x256xf32> -> vector<8x256xf32>
    %cst_32 = arith.constant dense<0.000000e+00> : vector<256xf32>
    %69 = vector.multi_reduction <add>, %68, %cst_32 [0] : vector<8x256xf32> to vector<256xf32>
    %70 = vector.shape_cast %69 : vector<256xf32> to vector<1x256xf32>
    %cst_33 = arith.constant 5.000000e-01 : f32
    %71 = vector.broadcast %cst_33 : f32 to vector<1x256xf32>
    %72 = arith.mulf %70, %71 : vector<1x256xf32>
    %73 = vector.broadcast %72 : vector<1x256xf32> to vector<8x256xf32>
    %74 = arith.subf %68, %73 : vector<8x256xf32>
    %cst_34 = arith.constant 0.000000e+00 : f32
    %75 = vector.broadcast %cst_34 : f32 to vector<8x256xf32>
    %76 = arith.select %2, %74, %75 : vector<8x256xi1>, vector<8x256xf32>
    %77 = arith.mulf %76, %76 : vector<8x256xf32>
    %cst_35 = arith.constant dense<0.000000e+00> : vector<256xf32>
    %78 = vector.multi_reduction <add>, %77, %cst_35 [0] : vector<8x256xf32> to vector<256xf32>
    %79 = vector.shape_cast %78 : vector<256xf32> to vector<1x256xf32>
    %cst_36 = arith.constant 5.000000e-01 : f32
    %80 = vector.broadcast %cst_36 : f32 to vector<1x256xf32>
    %81 = arith.mulf %79, %80 : vector<1x256xf32>
    %cst_37 = arith.constant 9.99999974E-6 : f32
    %82 = vector.broadcast %cst_37 : f32 to vector<1x256xf32>
    %83 = arith.addf %81, %82 : vector<1x256xf32>
    %84 = math.rsqrt %83 : vector<1x256xf32>
    %85 = arith.mulf %64, %84 : vector<1x256xf32>
    %86 = vector.broadcast %85 : vector<1x256xf32> to vector<8x256xf32>
    %87 = arith.mulf %76, %86 : vector<8x256xf32>
    %88 = vector.broadcast %65 : vector<1x256xf32> to vector<8x256xf32>
    %89 = arith.addf %87, %88 : vector<8x256xf32>
    %cst_38 = arith.constant 0.000000e+00 : f32
    %90 = vector.broadcast %cst_38 : f32 to vector<8x256xf32>
    %91 = arith.maximumf %89, %90 : vector<8x256xf32>
    %cst_39 = arith.constant 0.000000e+00 : f32
    %92 = vector.broadcast %cst_39 : f32 to vector<8x256xf32>
    %93 = arith.select %2, %91, %92 : vector<8x256xi1>, vector<8x256xf32>
    %c0_40 = arith.constant 0 : index
    %c0_41 = arith.constant 0 : index
    %94 = vector.load %arg4[%c0_40, %c0_41] : memref<256x128xbf16, #tpu.memory_space<vmem>>, vector<256x128xbf16>
    %95 = arith.extf %94 : vector<256x128xbf16> to vector<256x128xf32>
    %cst_42 = arith.constant dense<0.000000e+00> : vector<8x128xf32>
    %96 = tpu.matmul %93, %95, %cst_42 {dimension_numbers = #tpu.dot_dimension_numbers<[1], [0], [0], [1], [0, 0, 1, 1], [], []>} : vector<8x256xf32>, vector<256x128xf32>, vector<8x128xf32> -> vector<8x128xf32>
    %c6 = arith.constant 6 : index
    %c0_43 = arith.constant 0 : index
    %97 = vector.load %arg5[%c6, %c0_43] : memref<8x256xf32, #tpu.memory_space<vmem>>, vector<1x128xf32>
    %98 = vector.broadcast %97 : vector<1x128xf32> to vector<8x128xf32>
    %99 = arith.addf %96, %98 : vector<8x128xf32>
    %c0_44 = arith.constant 0 : index
    %c0_45 = arith.constant 0 : index
    %100 = vector.load %arg6[%c0_44, %c0_45] : memref<8x128xf32, #tpu.memory_space<vmem>>, vector<8x128xf32>
    tpu.vector_store %arg6[%c0_44, %c0_45], %99 {strides = array<i32>} : memref<8x128xf32, #tpu.memory_space<vmem>>, vector<8x128xf32>,
    return
  }
}

</mosaic_0001>

<llo_original>
// kernel: simple_dense_net_forward.1
$region0: #{simple_dense_net_forward.1}
  #allocation0 [shape = 'u32[]', space=smem, size = 0x4, offset = 0x4, fixed_abs, tag = 'smem constant byte address 0x4 - core index']
  #allocation1 [shape = 'u32[144,128]{1,0:T(1,128)}', space=vmem, size = 0x12000, scoped, tag = 'internal scratch']
  %s0 = inlined_call_operand.vmem [shape: f32[8,1024], index: 0, kind: input, shape index: {}]
  %s1 = inlined_call_operand.vmem [shape: bf16[1024,256], index: 1, kind: input, shape index: {}]
  %s2 = inlined_call_operand.vmem [shape: bf16[256,256], index: 2, kind: input, shape index: {}]
  %s3 = inlined_call_operand.vmem [shape: bf16[256,256], index: 3, kind: input, shape index: {}]
  %s4 = inlined_call_operand.vmem [shape: bf16[256,128], index: 4, kind: input, shape index: {}]
  %s5 = inlined_call_operand.vmem [shape: f32[8,256], index: 5, kind: input, shape index: {}]
  %s6 = inlined_call_operand.vmem [shape: f32[8,128], index: 6, kind: output, shape index: {}]
  %s7 = sld [smem:[#allocation0]]
  $region34: #{simple_dense_net_forward.1} parent=0
    _
  %s9 = ssub.s32 1, %s7
  %s10 = scalar_select 0, %s9, %s7
  // Predicated region
  $region2: #{simple_dense_net_forward.1} parent=0 // pred_check
    _
  $region3: #{simple_dense_net_forward.1} parent=0 // pred_check_branch
    %12 = sbr.rel (0) target = $region5
  $region4: #{simple_dense_net_forward.1} parent=0 // pred_region
    _
  $region5: #{simple_dense_net_forward.1} parent=0 // pred_fallthru
    _
  // Predicated region
  $region6: #{simple_dense_net_forward.1} parent=0 // pred_check
    _
  $region7: #{simple_dense_net_forward.1} parent=0 // pred_check_branch
    %14 = sbr.rel (0) target = $region9
  $region8: #{simple_dense_net_forward.1} parent=0 // pred_region
    _
  $region9: #{simple_dense_net_forward.1} parent=0 // pred_fallthru
    _
  // Predicated region
  $region10: #{simple_dense_net_forward.1} parent=0 // pred_check
    _
  $region11: #{simple_dense_net_forward.1} parent=0 // pred_check_branch
    %16 = sbr.rel (0) target = $region13
  $region12: #{simple_dense_net_forward.1} parent=0 // pred_region
    _
  $region13: #{simple_dense_net_forward.1} parent=0 // pred_fallthru
    _
  // Predicated region
  $region14: #{simple_dense_net_forward.1} parent=0 // pred_check
    _
  $region15: #{simple_dense_net_forward.1} parent=0 // pred_check_branch
    %18 = sbr.rel (0) target = $region17
  $region16: #{simple_dense_net_forward.1} parent=0 // pred_region
    _
  $region17: #{simple_dense_net_forward.1} parent=0 // pred_fallthru
    _
  // Predicated region
  $region18: #{simple_dense_net_forward.1} parent=0 // pred_check
    _
  $region19: #{simple_dense_net_forward.1} parent=0 // pred_check_branch
    %20 = sbr.rel (0) target = $region21
  $region20: #{simple_dense_net_forward.1} parent=0 // pred_region
    _
  $region21: #{simple_dense_net_forward.1} parent=0 // pred_fallthru
    _
  // Predicated region
  $region22: #{simple_dense_net_forward.1} parent=0 // pred_check
    _
  $region23: #{simple_dense_net_forward.1} parent=0 // pred_check_branch
    %22 = sbr.rel (0) target = $region25
  $region24: #{simple_dense_net_forward.1} parent=0 // pred_region
    _
  $region25: #{simple_dense_net_forward.1} parent=0 // pred_fallthru
    _
  %v23 = vlaneseq
  %v24 = vshrl.u32 %v23, 7
  %vm25 = vcmp.lt.s32.totalorder %v24, 2
  %v26 = vld [vmem:[%s0] sm:$0xff]
  %v27 = vld [vmem:[%s0 + $0x8] sm:$0xff]
  %v28 = vld [vmem:[%s0 + $0x10] sm:$0xff]
  %v29 = vld [vmem:[%s0 + $0x18] sm:$0xff]
  %v30 = vld [vmem:[%s0 + $0x20] sm:$0xff]
  %v31 = vld [vmem:[%s0 + $0x28] sm:$0xff]
  %v32 = vld [vmem:[%s0 + $0x30] sm:$0xff]
  %v33 = vld [vmem:[%s0 + $0x38] sm:$0xff]
  %v34 = vld [vmem:[%s5] ss:$8 sm:$0x3]
  %s35 = scalar_lea.vmem %s5, 1
  %v36 = vld [vmem:[%s35] ss:$8 sm:$0x3]
  %v37 = vld [vmem:[%s1] sm:$0xff]
  %v38 = vld [vmem:[%s1 + $0x8] sm:$0xff]
  %v39 = vld [vmem:[%s1 + $0x10] sm:$0xff]
  %v40 = vld [vmem:[%s1 + $0x18] sm:$0xff]
  %v41 = vld [vmem:[%s1 + $0x20] sm:$0xff]
  %v42 = vld [vmem:[%s1 + $0x28] sm:$0xff]
  %v43 = vld [vmem:[%s1 + $0x30] sm:$0xff]
  %v44 = vld [vmem:[%s1 + $0x38] sm:$0xff]
  %v45 = vld [vmem:[%s1 + $0x40] sm:$0xff]
  %v46 = vld [vmem:[%s1 + $0x48] sm:$0xff]
  %v47 = vld [vmem:[%s1 + $0x50] sm:$0xff]
  %v48 = vld [vmem:[%s1 + $0x58] sm:$0xff]
  %v49 = vld [vmem:[%s1 + $0x60] sm:$0xff]
  %v50 = vld [vmem:[%s1 + $0x68] sm:$0xff]
  %v51 = vld [vmem:[%s1 + $0x70] sm:$0xff]
  %v52 = vld [vmem:[%s1 + $0x78] sm:$0xff]
  %v53 = vld [vmem:[%s1 + $0x80] sm:$0xff]
  %v54 = vld [vmem:[%s1 + $0x88] sm:$0xff]
  %v55 = vld [vmem:[%s1 + $0x90] sm:$0xff]
  %v56 = vld [vmem:[%s1 + $0x98] sm:$0xff]
  %v57 = vld [vmem:[%s1 + $0xa0] sm:$0xff]
  %v58 = vld [vmem:[%s1 + $0xa8] sm:$0xff]
  %v59 = vld [vmem:[%s1 + $0xb0] sm:$0xff]
  %v60 = vld [vmem:[%s1 + $0xb8] sm:$0xff]
  %v61 = vld [vmem:[%s1 + $0xc0] sm:$0xff]
  %v62 = vld [vmem:[%s1 + $0xc8] sm:$0xff]
  %v63 = vld [vmem:[%s1 + $0xd0] sm:$0xff]
  %v64 = vld [vmem:[%s1 + $0xd8] sm:$0xff]
  %v65 = vld [vmem:[%s1 + $0xe0] sm:$0xff]
  %v66 = vld [vmem:[%s1 + $0xe8] sm:$0xff]
  %v67 = vld [vmem:[%s1 + $0xf0] sm:$0xff]
  %v68 = vld [vmem:[%s1 + $0xf8] sm:$0xff]
  %v69 = vld [vmem:[%s1 + $0x100] sm:$0xff]
  %v70 = vld [vmem:[%s1 + $0x108] sm:$0xff]
  %v71 = vld [vmem:[%s1 + $0x110] sm:$0xff]
  %v72 = vld [vmem:[%s1 + $0x118] sm:$0xff]
  %v73 = vld [vmem:[%s1 + $0x120] sm:$0xff]
  %v74 = vld [vmem:[%s1 + $0x128] sm:$0xff]
  %v75 = vld [vmem:[%s1 + $0x130] sm:$0xff]
  %v76 = vld [vmem:[%s1 + $0x138] sm:$0xff]
  %v77 = vld [vmem:[%s1 + $0x140] sm:$0xff]
  %v78 = vld [vmem:[%s1 + $0x148] sm:$0xff]
  %v79 = vld [vmem:[%s1 + $0x150] sm:$0xff]
  %v80 = vld [vmem:[%s1 + $0x158] sm:$0xff]
  %v81 = vld [vmem:[%s1 + $0x160] sm:$0xff]
  %v82 = vld [vmem:[%s1 + $0x168] sm:$0xff]
  %v83 = vld [vmem:[%s1 + $0x170] sm:$0xff]
  %v84 = vld [vmem:[%s1 + $0x178] sm:$0xff]
  %v85 = vld [vmem:[%s1 + $0x180] sm:$0xff]
  %v86 = vld [vmem:[%s1 + $0x188] sm:$0xff]
  %v87 = vld [vmem:[%s1 + $0x190] sm:$0xff]
  %v88 = vld [vmem:[%s1 + $0x198] sm:$0xff]
  %v89 = vld [vmem:[%s1 + $0x1a0] sm:$0xff]
  %v90 = vld [vmem:[%s1 + $0x1a8] sm:$0xff]
  %v91 = vld [vmem:[%s1 + $0x1b0] sm:$0xff]
  %v92 = vld [vmem:[%s1 + $0x1b8] sm:$0xff]
  %v93 = vld [vmem:[%s1 + $0x1c0] sm:$0xff]
  %v94 = vld [vmem:[%s1 + $0x1c8] sm:$0xff]
  %v95 = vld [vmem:[%s1 + $0x1d0] sm:$0xff]
  %v96 = vld [vmem:[%s1 + $0x1d8] sm:$0xff]
  %v97 = vld [vmem:[%s1 + $0x1e0] sm:$0xff]
  %v98 = vld [vmem:[%s1 + $0x1e8] sm:$0xff]
  %v99 = vld [vmem:[%s1 + $0x1f0] sm:$0xff]
  %v100 = vld [vmem:[%s1 + $0x1f8] sm:$0xff]
  %v101 = vld [vmem:[%s1 + $0x200] sm:$0xff]
  %v102 = vld [vmem:[%s1 + $0x208] sm:$0xff]
  %v103 = vld [vmem:[%s1 + $0x210] sm:$0xff]
  %v104 = vld [vmem:[%s1 + $0x218] sm:$0xff]
  %v105 = vld [vmem:[%s1 + $0x220] sm:$0xff]
  %v106 = vld [vmem:[%s1 + $0x228] sm:$0xff]
  %v107 = vld [vmem:[%s1 + $0x230] sm:$0xff]
  %v108 = vld [vmem:[%s1 + $0x238] sm:$0xff]
  %v109 = vld [vmem:[%s1 + $0x240] sm:$0xff]
  %v110 = vld [vmem:[%s1 + $0x248] sm:$0xff]
  %v111 = vld [vmem:[%s1 + $0x250] sm:$0xff]
  %v112 = vld [vmem:[%s1 + $0x258] sm:$0xff]
  %v113 = vld [vmem:[%s1 + $0x260] sm:$0xff]
  %v114 = vld [vmem:[%s1 + $0x268] sm:$0xff]
  %v115 = vld [vmem:[%s1 + $0x270] sm:$0xff]
  %v116 = vld [vmem:[%s1 + $0x278] sm:$0xff]
  %v117 = vld [vmem:[%s1 + $0x280] sm:$0xff]
  %v118 = vld [vmem:[%s1 + $0x288] sm:$0xff]
  %v119 = vld [vmem:[%s1 + $0x290] sm:$0xff]
  %v120 = vld [vmem:[%s1 + $0x298] sm:$0xff]
  %v121 = vld [vmem:[%s1 + $0x2a0] sm:$0xff]
  %v122 = vld [vmem:[%s1 + $0x2a8] sm:$0xff]
  %v123 = vld [vmem:[%s1 + $0x2b0] sm:$0xff]
  %v124 = vld [vmem:[%s1 + $0x2b8] sm:$0xff]
  %v125 = vld [vmem:[%s1 + $0x2c0] sm:$0xff]
  %v126 = vld [vmem:[%s1 + $0x2c8] sm:$0xff]
  %v127 = vld [vmem:[%s1 + $0x2d0] sm:$0xff]
  %v128 = vld [vmem:[%s1 + $0x2d8] sm:$0xff]
  %v129 = vld [vmem:[%s1 + $0x2e0] sm:$0xff]
  %v130 = vld [vmem:[%s1 + $0x2e8] sm:$0xff]
  %v131 = vld [vmem:[%s1 + $0x2f0] sm:$0xff]
  %v132 = vld [vmem:[%s1 + $0x2f8] sm:$0xff]
  %v133 = vld [vmem:[%s1 + $0x300] sm:$0xff]
  %v134 = vld [vmem:[%s1 + $0x308] sm:$0xff]
  %v135 = vld [vmem:[%s1 + $0x310] sm:$0xff]
  %v136 = vld [vmem:[%s1 + $0x318] sm:$0xff]
  %v137 = vld [vmem:[%s1 + $0x320] sm:$0xff]
  %v138 = vld [vmem:[%s1 + $0x328] sm:$0xff]
  %v139 = vld [vmem:[%s1 + $0x330] sm:$0xff]
  %v140 = vld [vmem:[%s1 + $0x338] sm:$0xff]
  %v141 = vld [vmem:[%s1 + $0x340] sm:$0xff]
  %v142 = vld [vmem:[%s1 + $0x348] sm:$0xff]
  %v143 = vld [vmem:[%s1 + $0x350] sm:$0xff]
  %v144 = vld [vmem:[%s1 + $0x358] sm:$0xff]
  %v145 = vld [vmem:[%s1 + $0x360] sm:$0xff]
  %v146 = vld [vmem:[%s1 + $0x368] sm:$0xff]
  %v147 = vld [vmem:[%s1 + $0x370] sm:$0xff]
  %v148 = vld [vmem:[%s1 + $0x378] sm:$0xff]
  %v149 = vld [vmem:[%s1 + $0x380] sm:$0xff]
  %v150 = vld [vmem:[%s1 + $0x388] sm:$0xff]
  %v151 = vld [vmem:[%s1 + $0x390] sm:$0xff]
  %v152 = vld [vmem:[%s1 + $0x398] sm:$0xff]
  %v153 = vld [vmem:[%s1 + $0x3a0] sm:$0xff]
  %v154 = vld [vmem:[%s1 + $0x3a8] sm:$0xff]
  %v155 = vld [vmem:[%s1 + $0x3b0] sm:$0xff]
  %v156 = vld [vmem:[%s1 + $0x3b8] sm:$0xff]
  %v157 = vld [vmem:[%s1 + $0x3c0] sm:$0xff]
  %v158 = vld [vmem:[%s1 + $0x3c8] sm:$0xff]
  %v159 = vld [vmem:[%s1 + $0x3d0] sm:$0xff]
  %v160 = vld [vmem:[%s1 + $0x3d8] sm:$0xff]
  %v161 = vld [vmem:[%s1 + $0x3e0] sm:$0xff]
  %v162 = vld [vmem:[%s1 + $0x3e8] sm:$0xff]
  %v163 = vld [vmem:[%s1 + $0x3f0] sm:$0xff]
  %v164 = vld [vmem:[%s1 + $0x3f8] sm:$0xff]
  %v165 = vunpack.c.l.bf16 %v37
  %v166 = vunpack.c.h.bf16 %v37
  %v167 = vunpack.c.l.bf16 %v38
  %v168 = vunpack.c.h.bf16 %v38
  %v169 = vunpack.c.l.bf16 %v39
  %v170 = vunpack.c.h.bf16 %v39
  %v171 = vunpack.c.l.bf16 %v40
  %v172 = vunpack.c.h.bf16 %v40
  %v173 = vunpack.c.l.bf16 %v41
  %v174 = vunpack.c.h.bf16 %v41
  %v175 = vunpack.c.l.bf16 %v42
  %v176 = vunpack.c.h.bf16 %v42
  %v177 = vunpack.c.l.bf16 %v43
  %v178 = vunpack.c.h.bf16 %v43
  %v179 = vunpack.c.l.bf16 %v44
  %v180 = vunpack.c.h.bf16 %v44
  %v181 = vunpack.c.l.bf16 %v45
  %v182 = vunpack.c.h.bf16 %v45
  %v183 = vunpack.c.l.bf16 %v46
  %v184 = vunpack.c.h.bf16 %v46
  %v185 = vunpack.c.l.bf16 %v47
  %v186 = vunpack.c.h.bf16 %v47
  %v187 = vunpack.c.l.bf16 %v48
  %v188 = vunpack.c.h.bf16 %v48
  %v189 = vunpack.c.l.bf16 %v49
  %v190 = vunpack.c.h.bf16 %v49
  %v191 = vunpack.c.l.bf16 %v50
  %v192 = vunpack.c.h.bf16 %v50
  %v193 = vunpack.c.l.bf16 %v51
  %v194 = vunpack.c.h.bf16 %v51
  %v195 = vunpack.c.l.bf16 %v52
  %v196 = vunpack.c.h.bf16 %v52
  %v197 = vunpack.c.l.bf16 %v53
  %v198 = vunpack.c.h.bf16 %v53
  %v199 = vunpack.c.l.bf16 %v54
  %v200 = vunpack.c.h.bf16 %v54
  %v201 = vunpack.c.l.bf16 %v55
  %v202 = vunpack.c.h.bf16 %v55
  %v203 = vunpack.c.l.bf16 %v56
  %v204 = vunpack.c.h.bf16 %v56
  %v205 = vunpack.c.l.bf16 %v57
  %v206 = vunpack.c.h.bf16 %v57
  %v207 = vunpack.c.l.bf16 %v58
  %v208 = vunpack.c.h.bf16 %v58
  %v209 = vunpack.c.l.bf16 %v59
  %v210 = vunpack.c.h.bf16 %v59
  %v211 = vunpack.c.l.bf16 %v60
  %v212 = vunpack.c.h.bf16 %v60
  %v213 = vunpack.c.l.bf16 %v61
  %v214 = vunpack.c.h.bf16 %v61
  %v215 = vunpack.c.l.bf16 %v62
  %v216 = vunpack.c.h.bf16 %v62
  %v217 = vunpack.c.l.bf16 %v63
  %v218 = vunpack.c.h.bf16 %v63
  %v219 = vunpack.c.l.bf16 %v64
  %v220 = vunpack.c.h.bf16 %v64
  %v221 = vunpack.c.l.bf16 %v65
  %v222 = vunpack.c.h.bf16 %v65
  %v223 = vunpack.c.l.bf16 %v66
  %v224 = vunpack.c.h.bf16 %v66
  %v225 = vunpack.c.l.bf16 %v67
  %v226 = vunpack.c.h.bf16 %v67
  %v227 = vunpack.c.l.bf16 %v68
  %v228 = vunpack.c.h.bf16 %v68
  %v229 = vunpack.c.l.bf16 %v69
  %v230 = vunpack.c.h.bf16 %v69
  %v231 = vunpack.c.l.bf16 %v70
  %v232 = vunpack.c.h.bf16 %v70
  %v233 = vunpack.c.l.bf16 %v71
  %v234 = vunpack.c.h.bf16 %v71
  %v235 = vunpack.c.l.bf16 %v72
  %v236 = vunpack.c.h.bf16 %v72
  %v237 = vunpack.c.l.bf16 %v73
  %v238 = vunpack.c.h.bf16 %v73
  %v239 = vunpack.c.l.bf16 %v74
  %v240 = vunpack.c.h.bf16 %v74
  %v241 = vunpack.c.l.bf16 %v75
  %v242 = vunpack.c.h.bf16 %v75
  %v243 = vunpack.c.l.bf16 %v76
  %v244 = vunpack.c.h.bf16 %v76
  %v245 = vunpack.c.l.bf16 %v77
  %v246 = vunpack.c.h.bf16 %v77
  %v247 = vunpack.c.l.bf16 %v78
  %v248 = vunpack.c.h.bf16 %v78
  %v249 = vunpack.c.l.bf16 %v79
  %v250 = vunpack.c.h.bf16 %v79
  %v251 = vunpack.c.l.bf16 %v80
  %v252 = vunpack.c.h.bf16 %v80
  %v253 = vunpack.c.l.bf16 %v81
  %v254 = vunpack.c.h.bf16 %v81
  %v255 = vunpack.c.l.bf16 %v82
  %v256 = vunpack.c.h.bf16 %v82
  %v257 = vunpack.c.l.bf16 %v83
  %v258 = vunpack.c.h.bf16 %v83
  %v259 = vunpack.c.l.bf16 %v84
  %v260 = vunpack.c.h.bf16 %v84
  %v261 = vunpack.c.l.bf16 %v85
  %v262 = vunpack.c.h.bf16 %v85
  %v263 = vunpack.c.l.bf16 %v86
  %v264 = vunpack.c.h.bf16 %v86
  %v265 = vunpack.c.l.bf16 %v87
  %v266 = vunpack.c.h.bf16 %v87
  %v267 = vunpack.c.l.bf16 %v88
  %v268 = vunpack.c.h.bf16 %v88
  %v269 = vunpack.c.l.bf16 %v89
  %v270 = vunpack.c.h.bf16 %v89
  %v271 = vunpack.c.l.bf16 %v90
  %v272 = vunpack.c.h.bf16 %v90
  %v273 = vunpack.c.l.bf16 %v91
  %v274 = vunpack.c.h.bf16 %v91
  %v275 = vunpack.c.l.bf16 %v92
  %v276 = vunpack.c.h.bf16 %v92
  %v277 = vunpack.c.l.bf16 %v93
  %v278 = vunpack.c.h.bf16 %v93
  %v279 = vunpack.c.l.bf16 %v94
  %v280 = vunpack.c.h.bf16 %v94
  %v281 = vunpack.c.l.bf16 %v95
  %v282 = vunpack.c.h.bf16 %v95
  %v283 = vunpack.c.l.bf16 %v96
  %v284 = vunpack.c.h.bf16 %v96
  %v285 = vunpack.c.l.bf16 %v97
  %v286 = vunpack.c.h.bf16 %v97
  %v287 = vunpack.c.l.bf16 %v98
  %v288 = vunpack.c.h.bf16 %v98
  %v289 = vunpack.c.l.bf16 %v99
  %v290 = vunpack.c.h.bf16 %v99
  %v291 = vunpack.c.l.bf16 %v100
  %v292 = vunpack.c.h.bf16 %v100
  %v293 = vunpack.c.l.bf16 %v101
  %v294 = vunpack.c.h.bf16 %v101
  %v295 = vunpack.c.l.bf16 %v102
  %v296 = vunpack.c.h.bf16 %v102
  %v297 = vunpack.c.l.bf16 %v103
  %v298 = vunpack.c.h.bf16 %v103
  %v299 = vunpack.c.l.bf16 %v104
  %v300 = vunpack.c.h.bf16 %v104
  %v301 = vunpack.c.l.bf16 %v105
  %v302 = vunpack.c.h.bf16 %v105
  %v303 = vunpack.c.l.bf16 %v106
  %v304 = vunpack.c.h.bf16 %v106
  %v305 = vunpack.c.l.bf16 %v107
  %v306 = vunpack.c.h.bf16 %v107
  %v307 = vunpack.c.l.bf16 %v108
  %v308 = vunpack.c.h.bf16 %v108
  %v309 = vunpack.c.l.bf16 %v109
  %v310 = vunpack.c.h.bf16 %v109
  %v311 = vunpack.c.l.bf16 %v110
  %v312 = vunpack.c.h.bf16 %v110
  %v313 = vunpack.c.l.bf16 %v111
  %v314 = vunpack.c.h.bf16 %v111
  %v315 = vunpack.c.l.bf16 %v112
  %v316 = vunpack.c.h.bf16 %v112
  %v317 = vunpack.c.l.bf16 %v113
  %v318 = vunpack.c.h.bf16 %v113
  %v319 = vunpack.c.l.bf16 %v114
  %v320 = vunpack.c.h.bf16 %v114
  %v321 = vunpack.c.l.bf16 %v115
  %v322 = vunpack.c.h.bf16 %v115
  %v323 = vunpack.c.l.bf16 %v116
  %v324 = vunpack.c.h.bf16 %v116
  %v325 = vunpack.c.l.bf16 %v117
  %v326 = vunpack.c.h.bf16 %v117
  %v327 = vunpack.c.l.bf16 %v118
  %v328 = vunpack.c.h.bf16 %v118
  %v329 = vunpack.c.l.bf16 %v119
  %v330 = vunpack.c.h.bf16 %v119
  %v331 = vunpack.c.l.bf16 %v120
  %v332 = vunpack.c.h.bf16 %v120
  %v333 = vunpack.c.l.bf16 %v121
  %v334 = vunpack.c.h.bf16 %v121
  %v335 = vunpack.c.l.bf16 %v122
  %v336 = vunpack.c.h.bf16 %v122
  %v337 = vunpack.c.l.bf16 %v123
  %v338 = vunpack.c.h.bf16 %v123
  %v339 = vunpack.c.l.bf16 %v124
  %v340 = vunpack.c.h.bf16 %v124
  %v341 = vunpack.c.l.bf16 %v125
  %v342 = vunpack.c.h.bf16 %v125
  %v343 = vunpack.c.l.bf16 %v126
  %v344 = vunpack.c.h.bf16 %v126
  %v345 = vunpack.c.l.bf16 %v127
  %v346 = vunpack.c.h.bf16 %v127
  %v347 = vunpack.c.l.bf16 %v128
  %v348 = vunpack.c.h.bf16 %v128
  %v349 = vunpack.c.l.bf16 %v129
  %v350 = vunpack.c.h.bf16 %v129
  %v351 = vunpack.c.l.bf16 %v130
  %v352 = vunpack.c.h.bf16 %v130
  %v353 = vunpack.c.l.bf16 %v131
  %v354 = vunpack.c.h.bf16 %v131
  %v355 = vunpack.c.l.bf16 %v132
  %v356 = vunpack.c.h.bf16 %v132
  %v357 = vunpack.c.l.bf16 %v133
  %v358 = vunpack.c.h.bf16 %v133
  %v359 = vunpack.c.l.bf16 %v134
  %v360 = vunpack.c.h.bf16 %v134
  %v361 = vunpack.c.l.bf16 %v135
  %v362 = vunpack.c.h.bf16 %v135
  %v363 = vunpack.c.l.bf16 %v136
  %v364 = vunpack.c.h.bf16 %v136
  %v365 = vunpack.c.l.bf16 %v137
  %v366 = vunpack.c.h.bf16 %v137
  %v367 = vunpack.c.l.bf16 %v138
  %v368 = vunpack.c.h.bf16 %v138
  %v369 = vunpack.c.l.bf16 %v139
  %v370 = vunpack.c.h.bf16 %v139
  %v371 = vunpack.c.l.bf16 %v140
  %v372 = vunpack.c.h.bf16 %v140
  %v373 = vunpack.c.l.bf16 %v141
  %v374 = vunpack.c.h.bf16 %v141
  %v375 = vunpack.c.l.bf16 %v142
  %v376 = vunpack.c.h.bf16 %v142
  %v377 = vunpack.c.l.bf16 %v143
  %v378 = vunpack.c.h.bf16 %v143
  %v379 = vunpack.c.l.bf16 %v144
  %v380 = vunpack.c.h.bf16 %v144
  %v381 = vunpack.c.l.bf16 %v145
  %v382 = vunpack.c.h.bf16 %v145
  %v383 = vunpack.c.l.bf16 %v146
  %v384 = vunpack.c.h.bf16 %v146
  %v385 = vunpack.c.l.bf16 %v147
  %v386 = vunpack.c.h.bf16 %v147
  %v387 = vunpack.c.l.bf16 %v148
  %v388 = vunpack.c.h.bf16 %v148
  %v389 = vunpack.c.l.bf16 %v149
  %v390 = vunpack.c.h.bf16 %v149
  %v391 = vunpack.c.l.bf16 %v150
  %v392 = vunpack.c.h.bf16 %v150
  %v393 = vunpack.c.l.bf16 %v151
  %v394 = vunpack.c.h.bf16 %v151
  %v395 = vunpack.c.l.bf16 %v152
  %v396 = vunpack.c.h.bf16 %v152
  %v397 = vunpack.c.l.bf16 %v153
  %v398 = vunpack.c.h.bf16 %v153
  %v399 = vunpack.c.l.bf16 %v154
  %v400 = vunpack.c.h.bf16 %v154
  %v401 = vunpack.c.l.bf16 %v155
  %v402 = vunpack.c.h.bf16 %v155
  %v403 = vunpack.c.l.bf16 %v156
  %v404 = vunpack.c.h.bf16 %v156
  %v405 = vunpack.c.l.bf16 %v157
  %v406 = vunpack.c.h.bf16 %v157
  %v407 = vunpack.c.l.bf16 %v158
  %v408 = vunpack.c.h.bf16 %v158
  %v409 = vunpack.c.l.bf16 %v159
  %v410 = vunpack.c.h.bf16 %v159
  %v411 = vunpack.c.l.bf16 %v160
  %v412 = vunpack.c.h.bf16 %v160
  %v413 = vunpack.c.l.bf16 %v161
  %v414 = vunpack.c.h.bf16 %v161
  %v415 = vunpack.c.l.bf16 %v162
  %v416 = vunpack.c.h.bf16 %v162
  %v417 = vunpack.c.l.bf16 %v163
  %v418 = vunpack.c.h.bf16 %v163
  %v419 = vunpack.c.l.bf16 %v164
  %v420 = vunpack.c.h.bf16 %v164
  %421 = vmatprep.subr.mxu0 %v166
  %422 = vmatpush1.msra.mxu0 %v165
  %423 = vmatprep.subr.mxu0 %v168
  %424 = vmatpush1.msra.mxu0 %v167
  %425 = vmatprep.subr.mxu0 %v170
  %426 = vmatpush1.msra.mxu0 %v169
  %427 = vmatprep.subr.mxu0 %v172
  %428 = vmatpush1.msra.mxu0 %v171
  %429 = vmatprep.subr.mxu0 %v174
  %430 = vmatpush1.msra.mxu0 %v173
  %431 = vmatprep.subr.mxu0 %v176
  %432 = vmatpush1.msra.mxu0 %v175
  %433 = vmatprep.subr.mxu0 %v178
  %434 = vmatpush1.msra.mxu0 %v177
  %435 = vmatprep.subr.mxu0 %v180
  %436 = vmatpush1.msra.mxu0 %v179
  %437 = vmatprep.subr.mxu0 %v182
  %438 = vmatpush1.msra.mxu0 %v181
  %439 = vmatprep.subr.mxu0 %v184
  %440 = vmatpush1.msra.mxu0 %v183
  %441 = vmatprep.subr.mxu0 %v186
  %442 = vmatpush1.msra.mxu0 %v185
  %443 = vmatprep.subr.mxu0 %v188
  %444 = vmatpush1.msra.mxu0 %v187
  %445 = vmatprep.subr.mxu0 %v190
  %446 = vmatpush1.msra.mxu0 %v189
  %447 = vmatprep.subr.mxu0 %v192
  %448 = vmatpush1.msra.mxu0 %v191
  %449 = vmatprep.subr.mxu0 %v194
  %450 = vmatpush1.msra.mxu0 %v193
  %451 = vmatprep.subr.mxu0 %v196
  %452 = vmatpush1.msra.mxu0 %v195
  %453 = vmatprep.subr.mxu0 %v198
  %454 = vmatpush1.msra.mxu0 %v197
  %455 = vmatprep.subr.mxu0 %v200
  %456 = vmatpush1.msra.mxu0 %v199
  %457 = vmatprep.subr.mxu0 %v202
  %458 = vmatpush1.msra.mxu0 %v201
  %459 = vmatprep.subr.mxu0 %v204
  %460 = vmatpush1.msra.mxu0 %v203
  %461 = vmatprep.subr.mxu0 %v206
  %462 = vmatpush1.msra.mxu0 %v205
  %463 = vmatprep.subr.mxu0 %v208
  %464 = vmatpush1.msra.mxu0 %v207
  %465 = vmatprep.subr.mxu0 %v210
  %466 = vmatpush1.msra.mxu0 %v209
  %467 = vmatprep.subr.mxu0 %v212
  %468 = vmatpush1.msra.mxu0 %v211
  %469 = vmatprep.subr.mxu0 %v214
  %470 = vmatpush1.msra.mxu0 %v213
  %471 = vmatprep.subr.mxu0 %v216
  %472 = vmatpush1.msra.mxu0 %v215
  %473 = vmatprep.subr.mxu0 %v218
  %474 = vmatpush1.msra.mxu0 %v217
  %475 = vmatprep.subr.mxu0 %v220
  %476 = vmatpush1.msra.mxu0 %v219
  %477 = vmatprep.subr.mxu0 %v222
  %478 = vmatpush1.msra.mxu0 %v221
  %479 = vmatprep.subr.mxu0 %v224
  %480 = vmatpush1.msra.mxu0 %v223
  %481 = vmatprep.subr.mxu0 %v226
  %482 = vmatpush1.msra.mxu0 %v225
  %483 = vmatprep.subr.mxu0 %v228
  %484 = vmatpush1.msra.mxu0 %v227
  %485 = vmatprep.mubr.f32.mxu0 %v27
  %486 = vmatmul.mubr.f32.gmra.mrb[0].mxu0 %v26
  %v487 = vpop.f32.mrb[0].mxu0
  %v488 = vadd.f32 0.0, %v487
  %v489 = vpop.f32.mrb[0].mxu0
  %v490 = vadd.f32 0.0, %v489
  %491 = vdwg.mxu0
  %492 = vmatprep.subr.mxu0 %v230
  %493 = vmatpush1.msra.mxu0 %v229
  %494 = vmatprep.subr.mxu0 %v232
  %495 = vmatpush1.msra.mxu0 %v231
  %496 = vmatprep.subr.mxu0 %v234
  %497 = vmatpush1.msra.mxu0 %v233
  %498 = vmatprep.subr.mxu0 %v236
  %499 = vmatpush1.msra.mxu0 %v235
  %500 = vmatprep.subr.mxu0 %v238
  %501 = vmatpush1.msra.mxu0 %v237
  %502 = vmatprep.subr.mxu0 %v240
  %503 = vmatpush1.msra.mxu0 %v239
  %504 = vmatprep.subr.mxu0 %v242
  %505 = vmatpush1.msra.mxu0 %v241
  %506 = vmatprep.subr.mxu0 %v244
  %507 = vmatpush1.msra.mxu0 %v243
  %508 = vmatprep.subr.mxu0 %v246
  %509 = vmatpush1.msra.mxu0 %v245
  %510 = vmatprep.subr.mxu0 %v248
  %511 = vmatpush1.msra.mxu0 %v247
  %512 = vmatprep.subr.mxu0 %v250
  %513 = vmatpush1.msra.mxu0 %v249
  %514 = vmatprep.subr.mxu0 %v252
  %515 = vmatpush1.msra.mxu0 %v251
  %516 = vmatprep.subr.mxu0 %v254
  %517 = vmatpush1.msra.mxu0 %v253
  %518 = vmatprep.subr.mxu0 %v256
  %519 = vmatpush1.msra.mxu0 %v255
  %520 = vmatprep.subr.mxu0 %v258
  %521 = vmatpush1.msra.mxu0 %v257
  %522 = vmatprep.subr.mxu0 %v260
  %523 = vmatpush1.msra.mxu0 %v259
  %524 = vmatprep.subr.mxu0 %v262
  %525 = vmatpush1.msra.mxu0 %v261
  %526 = vmatprep.subr.mxu0 %v264
  %527 = vmatpush1.msra.mxu0 %v263
  %528 = vmatprep.subr.mxu0 %v266
  %529 = vmatpush1.msra.mxu0 %v265
  %530 = vmatprep.subr.mxu0 %v268
  %531 = vmatpush1.msra.mxu0 %v267
  %532 = vmatprep.subr.mxu0 %v270
  %533 = vmatpush1.msra.mxu0 %v269
  %534 = vmatprep.subr.mxu0 %v272
  %535 = vmatpush1.msra.mxu0 %v271
  %536 = vmatprep.subr.mxu0 %v274
  %537 = vmatpush1.msra.mxu0 %v273
  %538 = vmatprep.subr.mxu0 %v276
  %539 = vmatpush1.msra.mxu0 %v275
  %540 = vmatprep.subr.mxu0 %v278
  %541 = vmatpush1.msra.mxu0 %v277
  %542 = vmatprep.subr.mxu0 %v280
  %543 = vmatpush1.msra.mxu0 %v279
  %544 = vmatprep.subr.mxu0 %v282
  %545 = vmatpush1.msra.mxu0 %v281
  %546 = vmatprep.subr.mxu0 %v284
  %547 = vmatpush1.msra.mxu0 %v283
  %548 = vmatprep.subr.mxu0 %v286
  %549 = vmatpush1.msra.mxu0 %v285
  %550 = vmatprep.subr.mxu0 %v288
  %551 = vmatpush1.msra.mxu0 %v287
  %552 = vmatprep.subr.mxu0 %v290
  %553 = vmatpush1.msra.mxu0 %v289
  %554 = vmatprep.subr.mxu0 %v292
  %555 = vmatpush1.msra.mxu0 %v291
  %556 = vmatprep.mubr.f32.mxu0 %v29
  %557 = vmatmul.mubr.f32.gmra.mrb[0].mxu0 %v28
  %v558 = vpop.f32.mrb[0].mxu0
  %v559 = vadd.f32 %v488, %v558
  %v560 = vpop.f32.mrb[0].mxu0
  %v561 = vadd.f32 %v490, %v560
  %562 = vdwg.mxu0
  %563 = vmatprep.subr.mxu0 %v294
  %564 = vmatpush1.msra.mxu0 %v293
  %565 = vmatprep.subr.mxu0 %v296
  %566 = vmatpush1.msra.mxu0 %v295
  %567 = vmatprep.subr.mxu0 %v298
  %568 = vmatpush1.msra.mxu0 %v297
  %569 = vmatprep.subr.mxu0 %v300
  %570 = vmatpush1.msra.mxu0 %v299
  %571 = vmatprep.subr.mxu0 %v302
  %572 = vmatpush1.msra.mxu0 %v301
  %573 = vmatprep.subr.mxu0 %v304
  %574 = vmatpush1.msra.mxu0 %v303
  %575 = vmatprep.subr.mxu0 %v306
  %576 = vmatpush1.msra.mxu0 %v305
  %577 = vmatprep.subr.mxu0 %v308
  %578 = vmatpush1.msra.mxu0 %v307
  %579 = vmatprep.subr.mxu0 %v310
  %580 = vmatpush1.msra.mxu0 %v309
  %581 = vmatprep.subr.mxu0 %v312
  %582 = vmatpush1.msra.mxu0 %v311
  %583 = vmatprep.subr.mxu0 %v314
  %584 = vmatpush1.msra.mxu0 %v313
  %585 = vmatprep.subr.mxu0 %v316
  %586 = vmatpush1.msra.mxu0 %v315
  %587 = vmatprep.subr.mxu0 %v318
  %588 = vmatpush1.msra.mxu0 %v317
  %589 = vmatprep.subr.mxu0 %v320
  %590 = vmatpush1.msra.mxu0 %v319
  %591 = vmatprep.subr.mxu0 %v322
  %592 = vmatpush1.msra.mxu0 %v321
  %593 = vmatprep.subr.mxu0 %v324
  %594 = vmatpush1.msra.mxu0 %v323
  %595 = vmatprep.subr.mxu0 %v326
  %596 = vmatpush1.msra.mxu0 %v325
  %597 = vmatprep.subr.mxu0 %v328
  %598 = vmatpush1.msra.mxu0 %v327
  %599 = vmatprep.subr.mxu0 %v330
  %600 = vmatpush1.msra.mxu0 %v329
  %601 = vmatprep.subr.mxu0 %v332
  %602 = vmatpush1.msra.mxu0 %v331
  %603 = vmatprep.subr.mxu0 %v334
  %604 = vmatpush1.msra.mxu0 %v333
  %605 = vmatprep.subr.mxu0 %v336
  %606 = vmatpush1.msra.mxu0 %v335
  %607 = vmatprep.subr.mxu0 %v338
  %608 = vmatpush1.msra.mxu0 %v337
  %609 = vmatprep.subr.mxu0 %v340
  %610 = vmatpush1.msra.mxu0 %v339
  %611 = vmatprep.subr.mxu0 %v342
  %612 = vmatpush1.msra.mxu0 %v341
  %613 = vmatprep.subr.mxu0 %v344
  %614 = vmatpush1.msra.mxu0 %v343
  %615 = vmatprep.subr.mxu0 %v346
  %616 = vmatpush1.msra.mxu0 %v345
  %617 = vmatprep.subr.mxu0 %v348
  %618 = vmatpush1.msra.mxu0 %v347
  %619 = vmatprep.subr.mxu0 %v350
  %620 = vmatpush1.msra.mxu0 %v349
  %621 = vmatprep.subr.mxu0 %v352
  %622 = vmatpush1.msra.mxu0 %v351
  %623 = vmatprep.subr.mxu0 %v354
  %624 = vmatpush1.msra.mxu0 %v353
  %625 = vmatprep.subr.mxu0 %v356
  %626 = vmatpush1.msra.mxu0 %v355
  %627 = vmatprep.mubr.f32.mxu0 %v31
  %628 = vmatmul.mubr.f32.gmra.mrb[0].mxu0 %v30
  %v629 = vpop.f32.mrb[0].mxu0
  %v630 = vadd.f32 %v559, %v629
  %v631 = vpop.f32.mrb[0].mxu0
  %v632 = vadd.f32 %v561, %v631
  %633 = vdwg.mxu0
  %634 = vmatprep.subr.mxu0 %v358
  %635 = vmatpush1.msra.mxu0 %v357
  %636 = vmatprep.subr.mxu0 %v360
  %637 = vmatpush1.msra.mxu0 %v359
  %638 = vmatprep.subr.mxu0 %v362
  %639 = vmatpush1.msra.mxu0 %v361
  %640 = vmatprep.subr.mxu0 %v364
  %641 = vmatpush1.msra.mxu0 %v363
  %642 = vmatprep.subr.mxu0 %v366
  %643 = vmatpush1.msra.mxu0 %v365
  %644 = vmatprep.subr.mxu0 %v368
  %645 = vmatpush1.msra.mxu0 %v367
  %646 = vmatprep.subr.mxu0 %v370
  %647 = vmatpush1.msra.mxu0 %v369
  %648 = vmatprep.subr.mxu0 %v372
  %649 = vmatpush1.msra.mxu0 %v371
  %650 = vmatprep.subr.mxu0 %v374
  %651 = vmatpush1.msra.mxu0 %v373
  %652 = vmatprep.subr.mxu0 %v376
  %653 = vmatpush1.msra.mxu0 %v375
  %654 = vmatprep.subr.mxu0 %v378
  %655 = vmatpush1.msra.mxu0 %v377
  %656 = vmatprep.subr.mxu0 %v380
  %657 = vmatpush1.msra.mxu0 %v379
  %658 = vmatprep.subr.mxu0 %v382
  %659 = vmatpush1.msra.mxu0 %v381
  %660 = vmatprep.subr.mxu0 %v384
  %661 = vmatpush1.msra.mxu0 %v383
  %662 = vmatprep.subr.mxu0 %v386
  %663 = vmatpush1.msra.mxu0 %v385
  %664 = vmatprep.subr.mxu0 %v388
  %665 = vmatpush1.msra.mxu0 %v387
  %666 = vmatprep.subr.mxu0 %v390
  %667 = vmatpush1.msra.mxu0 %v389
  %668 = vmatprep.subr.mxu0 %v392
  %669 = vmatpush1.msra.mxu0 %v391
  %670 = vmatprep.subr.mxu0 %v394
  %671 = vmatpush1.msra.mxu0 %v393
  %672 = vmatprep.subr.mxu0 %v396
  %673 = vmatpush1.msra.mxu0 %v395
  %674 = vmatprep.subr.mxu0 %v398
  %675 = vmatpush1.msra.mxu0 %v397
  %676 = vmatprep.subr.mxu0 %v400
  %677 = vmatpush1.msra.mxu0 %v399
  %678 = vmatprep.subr.mxu0 %v402
  %679 = vmatpush1.msra.mxu0 %v401
  %680 = vmatprep.subr.mxu0 %v404
  %681 = vmatpush1.msra.mxu0 %v403
  %682 = vmatprep.subr.mxu0 %v406
  %683 = vmatpush1.msra.mxu0 %v405
  %684 = vmatprep.subr.mxu0 %v408
  %685 = vmatpush1.msra.mxu0 %v407
  %686 = vmatprep.subr.mxu0 %v410
  %687 = vmatpush1.msra.mxu0 %v409
  %688 = vmatprep.subr.mxu0 %v412
  %689 = vmatpush1.msra.mxu0 %v411
  %690 = vmatprep.subr.mxu0 %v414
  %691 = vmatpush1.msra.mxu0 %v413
  %692 = vmatprep.subr.mxu0 %v416
  %693 = vmatpush1.msra.mxu0 %v415
  %694 = vmatprep.subr.mxu0 %v418
  %695 = vmatpush1.msra.mxu0 %v417
  %696 = vmatprep.subr.mxu0 %v420
  %697 = vmatpush1.msra.mxu0 %v419
  %698 = vmatprep.mubr.f32.mxu0 %v33
  %699 = vmatmul.mubr.f32.gmra.mrb[0].mxu0 %v32
  %v700 = vpop.f32.mrb[0].mxu0
  %v701 = vadd.f32 %v630, %v700
  %v702 = vpop.f32.mrb[0].mxu0
  %v703 = vadd.f32 %v632, %v702
  %704 = vdwg.mxu0
  %v705 = vrot.slane %v701, 4
  %v706 = vadd.f32 %v701, %v705
  %v707 = vrot.slane %v706, 2
  %v708 = vadd.f32 %v706, %v707
  %v709 = vrot.slane %v708, 1
  %v710 = vadd.f32 %v708, %v709
  %v711 = vrot.slane %v703, 4
  %v712 = vadd.f32 %v703, %v711
  %v713 = vrot.slane %v712, 2
  %v714 = vadd.f32 %v712, %v713
  %v715 = vrot.slane %v714, 1
  %v716 = vadd.f32 %v714, %v715
  %v717 = vmul.f32 %v710, 0.5
  %v718 = vmul.f32 %v716, 0.5
  %v719 = vsub.f32 %v701, %v717
  %v720 = vsub.f32 %v703, %v718
  %v721 = vsel %vm25, %v719, 0.0
  %v722 = vsel %vm25, %v720, 0.0
  %v723 = vmul.f32 %v721, %v721
  %v724 = vmul.f32 %v722, %v722
  %v725 = vrot.slane %v723, 4
  %v726 = vadd.f32 %v723, %v725
  %v727 = vrot.slane %v726, 2
  %v728 = vadd.f32 %v726, %v727
  %v729 = vrot.slane %v728, 1
  %v730 = vadd.f32 %v728, %v729
  %v731 = vrot.slane %v724, 4
  %v732 = vadd.f32 %v724, %v731
  %v733 = vrot.slane %v732, 2
  %v734 = vadd.f32 %v732, %v733
  %v735 = vrot.slane %v734, 1
  %v736 = vadd.f32 %v734, %v735
  %v737 = vmul.f32 %v730, 0.5
  %v738 = vmul.f32 %v736, 0.5
  %v739 = vadd.f32 %v737, 1e-05
  %v740 = vadd.f32 %v738, 1e-05
  %v741 = vrsqrt.pop %v739
  %v742 = vrsqrt.pop %v740
  %v745 = vcombine.low %v741, %v742
  %v747 = vunpack.c.l.s4 1966171168
  %v748 = vunpack.c.0.s8 %v747
  %v749 = vlaneseq
  %v750 = vshrl.u32 %v749, 7
  %v751 = vsub.s32 %v748, %v750
  %v752 = vrot.slane %v745, %v751
  %v754 = vunpack.c.l.s4 1966171168
  %v755 = vunpack.c.0.s8 %v754
  %v756 = vlaneseq
  %v757 = vshrl.u32 %v756, 7
  %v758 = vsub.s32 %v755, %v757
  %v759 = vrot.slane %v752, %v758
  %v761 = vmul.f32 %v34, %v759
  %v763 = vlaneseq
  %v764 = vshrl.u32 %v763, 7
  %v765 = vsub.s32 0, %v764
  %v766 = vrot.slane %v761, %v765
  %v767 = vlaneseq
  %v768 = vshrl.u32 %v767, 7
  %v769 = vsub.s32 1, %v768
  %v770 = vrot.slane %v761, %v769
  %v773 = vmul.f32 %v721, %v766
  %v774 = vmul.f32 %v722, %v770
  %v776 = vlaneseq
  %v777 = vshrl.u32 %v776, 7
  %v778 = vsub.s32 0, %v777
  %v779 = vrot.slane %v36, %v778
  %v780 = vlaneseq
  %v781 = vshrl.u32 %v780, 7
  %v782 = vsub.s32 1, %v781
  %v783 = vrot.slane %v36, %v782
  %v786 = vadd.f32 %v773, %v779
  %v787 = vadd.f32 %v774, %v783
  %v788 = vmax.f32 %v786, 0.0
  %v789 = vmax.f32 %v787, 0.0
  %v790 = vsel %vm25, %v788, 0.0
  %v791 = vsel %vm25, %v789, 0.0
  %s792 = scalar_lea.vmem %s5, 2
  %v793 = vld [vmem:[%s792] ss:$8 sm:$0x3]
  %s794 = scalar_lea.vmem %s5, 3
  %v795 = vld [vmem:[%s794] ss:$8 sm:$0x3]
  %v796 = vld [vmem:[%s2] sm:$0xff]
  %v797 = vld [vmem:[%s2 + $0x8] sm:$0xff]
  %v798 = vld [vmem:[%s2 + $0x10] sm:$0xff]
  %v799 = vld [vmem:[%s2 + $0x18] sm:$0xff]
  %v800 = vld [vmem:[%s2 + $0x20] sm:$0xff]
  %v801 = vld [vmem:[%s2 + $0x28] sm:$0xff]
  %v802 = vld [vmem:[%s2 + $0x30] sm:$0xff]
  %v803 = vld [vmem:[%s2 + $0x38] sm:$0xff]
  %v804 = vld [vmem:[%s2 + $0x40] sm:$0xff]
  %v805 = vld [vmem:[%s2 + $0x48] sm:$0xff]
  %v806 = vld [vmem:[%s2 + $0x50] sm:$0xff]
  %v807 = vld [vmem:[%s2 + $0x58] sm:$0xff]
  %v808 = vld [vmem:[%s2 + $0x60] sm:$0xff]
  %v809 = vld [vmem:[%s2 + $0x68] sm:$0xff]
  %v810 = vld [vmem:[%s2 + $0x70] sm:$0xff]
  %v811 = vld [vmem:[%s2 + $0x78] sm:$0xff]
  %v812 = vld [vmem:[%s2 + $0x80] sm:$0xff]
  %v813 = vld [vmem:[%s2 + $0x88] sm:$0xff]
  %v814 = vld [vmem:[%s2 + $0x90] sm:$0xff]
  %v815 = vld [vmem:[%s2 + $0x98] sm:$0xff]
  %v816 = vld [vmem:[%s2 + $0xa0] sm:$0xff]
  %v817 = vld [vmem:[%s2 + $0xa8] sm:$0xff]
  %v818 = vld [vmem:[%s2 + $0xb0] sm:$0xff]
  %v819 = vld [vmem:[%s2 + $0xb8] sm:$0xff]
  %v820 = vld [vmem:[%s2 + $0xc0] sm:$0xff]
  %v821 = vld [vmem:[%s2 + $0xc8] sm:$0xff]
  %v822 = vld [vmem:[%s2 + $0xd0] sm:$0xff]
  %v823 = vld [vmem:[%s2 + $0xd8] sm:$0xff]
  %v824 = vld [vmem:[%s2 + $0xe0] sm:$0xff]
  %v825 = vld [vmem:[%s2 + $0xe8] sm:$0xff]
  %v826 = vld [vmem:[%s2 + $0xf0] sm:$0xff]
  %v827 = vld [vmem:[%s2 + $0xf8] sm:$0xff]
  %v828 = vunpack.c.l.bf16 %v796
  %v829 = vunpack.c.h.bf16 %v796
  %v830 = vunpack.c.l.bf16 %v797
  %v831 = vunpack.c.h.bf16 %v797
  %v832 = vunpack.c.l.bf16 %v798
  %v833 = vunpack.c.h.bf16 %v798
  %v834 = vunpack.c.l.bf16 %v799
  %v835 = vunpack.c.h.bf16 %v799
  %v836 = vunpack.c.l.bf16 %v800
  %v837 = vunpack.c.h.bf16 %v800
  %v838 = vunpack.c.l.bf16 %v801
  %v839 = vunpack.c.h.bf16 %v801
  %v840 = vunpack.c.l.bf16 %v802
  %v841 = vunpack.c.h.bf16 %v802
  %v842 = vunpack.c.l.bf16 %v803
  %v843 = vunpack.c.h.bf16 %v803
  %v844 = vunpack.c.l.bf16 %v804
  %v845 = vunpack.c.h.bf16 %v804
  %v846 = vunpack.c.l.bf16 %v805
  %v847 = vunpack.c.h.bf16 %v805
  %v848 = vunpack.c.l.bf16 %v806
  %v849 = vunpack.c.h.bf16 %v806
  %v850 = vunpack.c.l.bf16 %v807
  %v851 = vunpack.c.h.bf16 %v807
  %v852 = vunpack.c.l.bf16 %v808
  %v853 = vunpack.c.h.bf16 %v808
  %v854 = vunpack.c.l.bf16 %v809
  %v855 = vunpack.c.h.bf16 %v809
  %v856 = vunpack.c.l.bf16 %v810
  %v857 = vunpack.c.h.bf16 %v810
  %v858 = vunpack.c.l.bf16 %v811
  %v859 = vunpack.c.h.bf16 %v811
  %v860 = vunpack.c.l.bf16 %v812
  %v861 = vunpack.c.h.bf16 %v812
  %v862 = vunpack.c.l.bf16 %v813
  %v863 = vunpack.c.h.bf16 %v813
  %v864 = vunpack.c.l.bf16 %v814
  %v865 = vunpack.c.h.bf16 %v814
  %v866 = vunpack.c.l.bf16 %v815
  %v867 = vunpack.c.h.bf16 %v815
  %v868 = vunpack.c.l.bf16 %v816
  %v869 = vunpack.c.h.bf16 %v816
  %v870 = vunpack.c.l.bf16 %v817
  %v871 = vunpack.c.h.bf16 %v817
  %v872 = vunpack.c.l.bf16 %v818
  %v873 = vunpack.c.h.bf16 %v818
  %v874 = vunpack.c.l.bf16 %v819
  %v875 = vunpack.c.h.bf16 %v819
  %v876 = vunpack.c.l.bf16 %v820
  %v877 = vunpack.c.h.bf16 %v820
  %v878 = vunpack.c.l.bf16 %v821
  %v879 = vunpack.c.h.bf16 %v821
  %v880 = vunpack.c.l.bf16 %v822
  %v881 = vunpack.c.h.bf16 %v822
  %v882 = vunpack.c.l.bf16 %v823
  %v883 = vunpack.c.h.bf16 %v823
  %v884 = vunpack.c.l.bf16 %v824
  %v885 = vunpack.c.h.bf16 %v824
  %v886 = vunpack.c.l.bf16 %v825
  %v887 = vunpack.c.h.bf16 %v825
  %v888 = vunpack.c.l.bf16 %v826
  %v889 = vunpack.c.h.bf16 %v826
  %v890 = vunpack.c.l.bf16 %v827
  %v891 = vunpack.c.h.bf16 %v827
  %892 = vmatprep.subr.mxu0 %v829
  %893 = vmatpush1.msra.mxu0 %v828
  %894 = vmatprep.subr.mxu0 %v831
  %895 = vmatpush1.msra.mxu0 %v830
  %896 = vmatprep.subr.mxu0 %v833
  %897 = vmatpush1.msra.mxu0 %v832
  %898 = vmatprep.subr.mxu0 %v835
  %899 = vmatpush1.msra.mxu0 %v834
  %900 = vmatprep.subr.mxu0 %v837
  %901 = vmatpush1.msra.mxu0 %v836
  %902 = vmatprep.subr.mxu0 %v839
  %903 = vmatpush1.msra.mxu0 %v838
  %904 = vmatprep.subr.mxu0 %v841
  %905 = vmatpush1.msra.mxu0 %v840
  %906 = vmatprep.subr.mxu0 %v843
  %907 = vmatpush1.msra.mxu0 %v842
  %908 = vmatprep.subr.mxu0 %v845
  %909 = vmatpush1.msra.mxu0 %v844
  %910 = vmatprep.subr.mxu0 %v847
  %911 = vmatpush1.msra.mxu0 %v846
  %912 = vmatprep.subr.mxu0 %v849
  %913 = vmatpush1.msra.mxu0 %v848
  %914 = vmatprep.subr.mxu0 %v851
  %915 = vmatpush1.msra.mxu0 %v850
  %916 = vmatprep.subr.mxu0 %v853
  %917 = vmatpush1.msra.mxu0 %v852
  %918 = vmatprep.subr.mxu0 %v855
  %919 = vmatpush1.msra.mxu0 %v854
  %920 = vmatprep.subr.mxu0 %v857
  %921 = vmatpush1.msra.mxu0 %v856
  %922 = vmatprep.subr.mxu0 %v859
  %923 = vmatpush1.msra.mxu0 %v858
  %924 = vmatprep.subr.mxu0 %v861
  %925 = vmatpush1.msra.mxu0 %v860
  %926 = vmatprep.subr.mxu0 %v863
  %927 = vmatpush1.msra.mxu0 %v862
  %928 = vmatprep.subr.mxu0 %v865
  %929 = vmatpush1.msra.mxu0 %v864
  %930 = vmatprep.subr.mxu0 %v867
  %931 = vmatpush1.msra.mxu0 %v866
  %932 = vmatprep.subr.mxu0 %v869
  %933 = vmatpush1.msra.mxu0 %v868
  %934 = vmatprep.subr.mxu0 %v871
  %935 = vmatpush1.msra.mxu0 %v870
  %936 = vmatprep.subr.mxu0 %v873
  %937 = vmatpush1.msra.mxu0 %v872
  %938 = vmatprep.subr.mxu0 %v875
  %939 = vmatpush1.msra.mxu0 %v874
  %940 = vmatprep.subr.mxu0 %v877
  %941 = vmatpush1.msra.mxu0 %v876
  %942 = vmatprep.subr.mxu0 %v879
  %943 = vmatpush1.msra.mxu0 %v878
  %944 = vmatprep.subr.mxu0 %v881
  %945 = vmatpush1.msra.mxu0 %v880
  %946 = vmatprep.subr.mxu0 %v883
  %947 = vmatpush1.msra.mxu0 %v882
  %948 = vmatprep.subr.mxu0 %v885
  %949 = vmatpush1.msra.mxu0 %v884
  %950 = vmatprep.subr.mxu0 %v887
  %951 = vmatpush1.msra.mxu0 %v886
  %952 = vmatprep.subr.mxu0 %v889
  %953 = vmatpush1.msra.mxu0 %v888
  %954 = vmatprep.subr.mxu0 %v891
  %955 = vmatpush1.msra.mxu0 %v890
  %956 = vmatprep.mubr.f32.mxu0 %v791
  %957 = vmatmul.mubr.f32.gmra.mrb[0].mxu0 %v790
  %v958 = vpop.f32.mrb[0].mxu0
  %v959 = vadd.f32 0.0, %v958
  %v960 = vpop.f32.mrb[0].mxu0
  %v961 = vadd.f32 0.0, %v960
  %962 = vdwg.mxu0
  %v963 = vrot.slane %v959, 4
  %v964 = vadd.f32 %v959, %v963
  %v965 = vrot.slane %v964, 2
  %v966 = vadd.f32 %v964, %v965
  %v967 = vrot.slane %v966, 1
  %v968 = vadd.f32 %v966, %v967
  %v969 = vrot.slane %v961, 4
  %v970 = vadd.f32 %v961, %v969
  %v971 = vrot.slane %v970, 2
  %v972 = vadd.f32 %v970, %v971
  %v973 = vrot.slane %v972, 1
  %v974 = vadd.f32 %v972, %v973
  %v975 = vmul.f32 %v968, 0.5
  %v976 = vmul.f32 %v974, 0.5
  %v977 = vsub.f32 %v959, %v975
  %v978 = vsub.f32 %v961, %v976
  %v979 = vsel %vm25, %v977, 0.0
  %v980 = vsel %vm25, %v978, 0.0
  %v981 = vmul.f32 %v979, %v979
  %v982 = vmul.f32 %v980, %v980
  %v983 = vrot.slane %v981, 4
  %v984 = vadd.f32 %v981, %v983
  %v985 = vrot.slane %v984, 2
  %v986 = vadd.f32 %v984, %v985
  %v987 = vrot.slane %v986, 1
  %v988 = vadd.f32 %v986, %v987
  %v989 = vrot.slane %v982, 4
  %v990 = vadd.f32 %v982, %v989
  %v991 = vrot.slane %v990, 2
  %v992 = vadd.f32 %v990, %v991
  %v993 = vrot.slane %v992, 1
  %v994 = vadd.f32 %v992, %v993
  %v995 = vmul.f32 %v988, 0.5
  %v996 = vmul.f32 %v994, 0.5
  %v997 = vadd.f32 %v995, 1e-05
  %v998 = vadd.f32 %v996, 1e-05
  %v999 = vrsqrt.pop %v997
  %v1000 = vrsqrt.pop %v998
  %v1003 = vcombine.low %v999, %v1000
  %v1005 = vunpack.c.l.s4 1966171168
  %v1006 = vunpack.c.0.s8 %v1005
  %v1007 = vlaneseq
  %v1008 = vshrl.u32 %v1007, 7
  %v1009 = vsub.s32 %v1006, %v1008
  %v1010 = vrot.slane %v1003, %v1009
  %v1012 = vunpack.c.l.s4 1966171168
  %v1013 = vunpack.c.0.s8 %v1012
  %v1014 = vlaneseq
  %v1015 = vshrl.u32 %v1014, 7
  %v1016 = vsub.s32 %v1013, %v1015
  %v1017 = vrot.slane %v1010, %v1016
  %v1019 = vmul.f32 %v793, %v1017
  %v1021 = vlaneseq
  %v1022 = vshrl.u32 %v1021, 7
  %v1023 = vsub.s32 0, %v1022
  %v1024 = vrot.slane %v1019, %v1023
  %v1025 = vlaneseq
  %v1026 = vshrl.u32 %v1025, 7
  %v1027 = vsub.s32 1, %v1026
  %v1028 = vrot.slane %v1019, %v1027
  %v1031 = vmul.f32 %v979, %v1024
  %v1032 = vmul.f32 %v980, %v1028
  %v1034 = vlaneseq
  %v1035 = vshrl.u32 %v1034, 7
  %v1036 = vsub.s32 0, %v1035
  %v1037 = vrot.slane %v795, %v1036
  %v1038 = vlaneseq
  %v1039 = vshrl.u32 %v1038, 7
  %v1040 = vsub.s32 1, %v1039
  %v1041 = vrot.slane %v795, %v1040
  %v1044 = vadd.f32 %v1031, %v1037
  %v1045 = vadd.f32 %v1032, %v1041
  %v1046 = vmax.f32 %v1044, 0.0
  %v1047 = vmax.f32 %v1045, 0.0
  %v1048 = vsel %vm25, %v1046, 0.0
  %v1049 = vsel %vm25, %v1047, 0.0
  %s1050 = scalar_lea.vmem %s5, 4
  %v1051 = vld [vmem:[%s1050] ss:$8 sm:$0x3]
  %s1052 = scalar_lea.vmem %s5, 5
  %v1053 = vld [vmem:[%s1052] ss:$8 sm:$0x3]
  %v1054 = vld [vmem:[%s3] sm:$0xff]
  %v1055 = vld [vmem:[%s3 + $0x8] sm:$0xff]
  %v1056 = vld [vmem:[%s3 + $0x10] sm:$0xff]
  %v1057 = vld [vmem:[%s3 + $0x18] sm:$0xff]
  %v1058 = vld [vmem:[%s3 + $0x20] sm:$0xff]
  %v1059 = vld [vmem:[%s3 + $0x28] sm:$0xff]
  %v1060 = vld [vmem:[%s3 + $0x30] sm:$0xff]
  %v1061 = vld [vmem:[%s3 + $0x38] sm:$0xff]
  %v1062 = vld [vmem:[%s3 + $0x40] sm:$0xff]
  %v1063 = vld [vmem:[%s3 + $0x48] sm:$0xff]
  %v1064 = vld [vmem:[%s3 + $0x50] sm:$0xff]
  %v1065 = vld [vmem:[%s3 + $0x58] sm:$0xff]
  %v1066 = vld [vmem:[%s3 + $0x60] sm:$0xff]
  %v1067 = vld [vmem:[%s3 + $0x68] sm:$0xff]
  %v1068 = vld [vmem:[%s3 + $0x70] sm:$0xff]
  %v1069 = vld [vmem:[%s3 + $0x78] sm:$0xff]
  %v1070 = vld [vmem:[%s3 + $0x80] sm:$0xff]
  %v1071 = vld [vmem:[%s3 + $0x88] sm:$0xff]
  %v1072 = vld [vmem:[%s3 + $0x90] sm:$0xff]
  %v1073 = vld [vmem:[%s3 + $0x98] sm:$0xff]
  %v1074 = vld [vmem:[%s3 + $0xa0] sm:$0xff]
  %v1075 = vld [vmem:[%s3 + $0xa8] sm:$0xff]
  %v1076 = vld [vmem:[%s3 + $0xb0] sm:$0xff]
  %v1077 = vld [vmem:[%s3 + $0xb8] sm:$0xff]
  %v1078 = vld [vmem:[%s3 + $0xc0] sm:$0xff]
  %v1079 = vld [vmem:[%s3 + $0xc8] sm:$0xff]
  %v1080 = vld [vmem:[%s3 + $0xd0] sm:$0xff]
  %v1081 = vld [vmem:[%s3 + $0xd8] sm:$0xff]
  %v1082 = vld [vmem:[%s3 + $0xe0] sm:$0xff]
  %v1083 = vld [vmem:[%s3 + $0xe8] sm:$0xff]
  %v1084 = vld [vmem:[%s3 + $0xf0] sm:$0xff]
  %v1085 = vld [vmem:[%s3 + $0xf8] sm:$0xff]
  %v1086 = vunpack.c.l.bf16 %v1054
  %v1087 = vunpack.c.h.bf16 %v1054
  %v1088 = vunpack.c.l.bf16 %v1055
  %v1089 = vunpack.c.h.bf16 %v1055
  %v1090 = vunpack.c.l.bf16 %v1056
  %v1091 = vunpack.c.h.bf16 %v1056
  %v1092 = vunpack.c.l.bf16 %v1057
  %v1093 = vunpack.c.h.bf16 %v1057
  %v1094 = vunpack.c.l.bf16 %v1058
  %v1095 = vunpack.c.h.bf16 %v1058
  %v1096 = vunpack.c.l.bf16 %v1059
  %v1097 = vunpack.c.h.bf16 %v1059
  %v1098 = vunpack.c.l.bf16 %v1060
  %v1099 = vunpack.c.h.bf16 %v1060
  %v1100 = vunpack.c.l.bf16 %v1061
  %v1101 = vunpack.c.h.bf16 %v1061
  %v1102 = vunpack.c.l.bf16 %v1062
  %v1103 = vunpack.c.h.bf16 %v1062
  %v1104 = vunpack.c.l.bf16 %v1063
  %v1105 = vunpack.c.h.bf16 %v1063
  %v1106 = vunpack.c.l.bf16 %v1064
  %v1107 = vunpack.c.h.bf16 %v1064
  %v1108 = vunpack.c.l.bf16 %v1065
  %v1109 = vunpack.c.h.bf16 %v1065
  %v1110 = vunpack.c.l.bf16 %v1066
  %v1111 = vunpack.c.h.bf16 %v1066
  %v1112 = vunpack.c.l.bf16 %v1067
  %v1113 = vunpack.c.h.bf16 %v1067
  %v1114 = vunpack.c.l.bf16 %v1068
  %v1115 = vunpack.c.h.bf16 %v1068
  %v1116 = vunpack.c.l.bf16 %v1069
  %v1117 = vunpack.c.h.bf16 %v1069
  %v1118 = vunpack.c.l.bf16 %v1070
  %v1119 = vunpack.c.h.bf16 %v1070
  %v1120 = vunpack.c.l.bf16 %v1071
  %v1121 = vunpack.c.h.bf16 %v1071
  %v1122 = vunpack.c.l.bf16 %v1072
  %v1123 = vunpack.c.h.bf16 %v1072
  %v1124 = vunpack.c.l.bf16 %v1073
  %v1125 = vunpack.c.h.bf16 %v1073
  %v1126 = vunpack.c.l.bf16 %v1074
  %v1127 = vunpack.c.h.bf16 %v1074
  %v1128 = vunpack.c.l.bf16 %v1075
  %v1129 = vunpack.c.h.bf16 %v1075
  %v1130 = vunpack.c.l.bf16 %v1076
  %v1131 = vunpack.c.h.bf16 %v1076
  %v1132 = vunpack.c.l.bf16 %v1077
  %v1133 = vunpack.c.h.bf16 %v1077
  %v1134 = vunpack.c.l.bf16 %v1078
  %v1135 = vunpack.c.h.bf16 %v1078
  %v1136 = vunpack.c.l.bf16 %v1079
  %v1137 = vunpack.c.h.bf16 %v1079
  %v1138 = vunpack.c.l.bf16 %v1080
  %v1139 = vunpack.c.h.bf16 %v1080
  %v1140 = vunpack.c.l.bf16 %v1081
  %v1141 = vunpack.c.h.bf16 %v1081
  %v1142 = vunpack.c.l.bf16 %v1082
  %v1143 = vunpack.c.h.bf16 %v1082
  %v1144 = vunpack.c.l.bf16 %v1083
  %v1145 = vunpack.c.h.bf16 %v1083
  %v1146 = vunpack.c.l.bf16 %v1084
  %v1147 = vunpack.c.h.bf16 %v1084
  %v1148 = vunpack.c.l.bf16 %v1085
  %v1149 = vunpack.c.h.bf16 %v1085
  %1150 = vmatprep.subr.mxu0 %v1087
  %1151 = vmatpush1.msra.mxu0 %v1086
  %1152 = vmatprep.subr.mxu0 %v1089
  %1153 = vmatpush1.msra.mxu0 %v1088
  %1154 = vmatprep.subr.mxu0 %v1091
  %1155 = vmatpush1.msra.mxu0 %v1090
  %1156 = vmatprep.subr.mxu0 %v1093
  %1157 = vmatpush1.msra.mxu0 %v1092
  %1158 = vmatprep.subr.mxu0 %v1095
  %1159 = vmatpush1.msra.mxu0 %v1094
  %1160 = vmatprep.subr.mxu0 %v1097
  %1161 = vmatpush1.msra.mxu0 %v1096
  %1162 = vmatprep.subr.mxu0 %v1099
  %1163 = vmatpush1.msra.mxu0 %v1098
  %1164 = vmatprep.subr.mxu0 %v1101
  %1165 = vmatpush1.msra.mxu0 %v1100
  %1166 = vmatprep.subr.mxu0 %v1103
  %1167 = vmatpush1.msra.mxu0 %v1102
  %1168 = vmatprep.subr.mxu0 %v1105
  %1169 = vmatpush1.msra.mxu0 %v1104
  %1170 = vmatprep.subr.mxu0 %v1107
  %1171 = vmatpush1.msra.mxu0 %v1106
  %1172 = vmatprep.subr.mxu0 %v1109
  %1173 = vmatpush1.msra.mxu0 %v1108
  %1174 = vmatprep.subr.mxu0 %v1111
  %1175 = vmatpush1.msra.mxu0 %v1110
  %1176 = vmatprep.subr.mxu0 %v1113
  %1177 = vmatpush1.msra.mxu0 %v1112
  %1178 = vmatprep.subr.mxu0 %v1115
  %1179 = vmatpush1.msra.mxu0 %v1114
  %1180 = vmatprep.subr.mxu0 %v1117
  %1181 = vmatpush1.msra.mxu0 %v1116
  %1182 = vmatprep.subr.mxu0 %v1119
  %1183 = vmatpush1.msra.mxu0 %v1118
  %1184 = vmatprep.subr.mxu0 %v1121
  %1185 = vmatpush1.msra.mxu0 %v1120
  %1186 = vmatprep.subr.mxu0 %v1123
  %1187 = vmatpush1.msra.mxu0 %v1122
  %1188 = vmatprep.subr.mxu0 %v1125
  %1189 = vmatpush1.msra.mxu0 %v1124
  %1190 = vmatprep.subr.mxu0 %v1127
  %1191 = vmatpush1.msra.mxu0 %v1126
  %1192 = vmatprep.subr.mxu0 %v1129
  %1193 = vmatpush1.msra.mxu0 %v1128
  %1194 = vmatprep.subr.mxu0 %v1131
  %1195 = vmatpush1.msra.mxu0 %v1130
  %1196 = vmatprep.subr.mxu0 %v1133
  %1197 = vmatpush1.msra.mxu0 %v1132
  %1198 = vmatprep.subr.mxu0 %v1135
  %1199 = vmatpush1.msra.mxu0 %v1134
  %1200 = vmatprep.subr.mxu0 %v1137
  %1201 = vmatpush1.msra.mxu0 %v1136
  %1202 = vmatprep.subr.mxu0 %v1139
  %1203 = vmatpush1.msra.mxu0 %v1138
  %1204 = vmatprep.subr.mxu0 %v1141
  %1205 = vmatpush1.msra.mxu0 %v1140
  %1206 = vmatprep.subr.mxu0 %v1143
  %1207 = vmatpush1.msra.mxu0 %v1142
  %1208 = vmatprep.subr.mxu0 %v1145
  %1209 = vmatpush1.msra.mxu0 %v1144
  %1210 = vmatprep.subr.mxu0 %v1147
  %1211 = vmatpush1.msra.mxu0 %v1146
  %1212 = vmatprep.subr.mxu0 %v1149
  %1213 = vmatpush1.msra.mxu0 %v1148
  %1214 = vmatprep.mubr.f32.mxu0 %v1049
  %1215 = vmatmul.mubr.f32.gmra.mrb[0].mxu0 %v1048
  %v1216 = vpop.f32.mrb[0].mxu0
  %v1217 = vadd.f32 0.0, %v1216
  %v1218 = vpop.f32.mrb[0].mxu0
  %v1219 = vadd.f32 0.0, %v1218
  %1220 = vdwg.mxu0
  %v1221 = vrot.slane %v1217, 4
  %v1222 = vadd.f32 %v1217, %v1221
  %v1223 = vrot.slane %v1222, 2
  %v1224 = vadd.f32 %v1222, %v1223
  %v1225 = vrot.slane %v1224, 1
  %v1226 = vadd.f32 %v1224, %v1225
  %v1227 = vrot.slane %v1219, 4
  %v1228 = vadd.f32 %v1219, %v1227
  %v1229 = vrot.slane %v1228, 2
  %v1230 = vadd.f32 %v1228, %v1229
  %v1231 = vrot.slane %v1230, 1
  %v1232 = vadd.f32 %v1230, %v1231
  %v1233 = vmul.f32 %v1226, 0.5
  %v1234 = vmul.f32 %v1232, 0.5
  %v1235 = vsub.f32 %v1217, %v1233
  %v1236 = vsub.f32 %v1219, %v1234
  %v1237 = vsel %vm25, %v1235, 0.0
  %v1238 = vsel %vm25, %v1236, 0.0
  %v1239 = vmul.f32 %v1237, %v1237
  %v1240 = vmul.f32 %v1238, %v1238
  %v1241 = vrot.slane %v1239, 4
  %v1242 = vadd.f32 %v1239, %v1241
  %v1243 = vrot.slane %v1242, 2
  %v1244 = vadd.f32 %v1242, %v1243
  %v1245 = vrot.slane %v1244, 1
  %v1246 = vadd.f32 %v1244, %v1245
  %v1247 = vrot.slane %v1240, 4
  %v1248 = vadd.f32 %v1240, %v1247
  %v1249 = vrot.slane %v1248, 2
  %v1250 = vadd.f32 %v1248, %v1249
  %v1251 = vrot.slane %v1250, 1
  %v1252 = vadd.f32 %v1250, %v1251
  %v1253 = vmul.f32 %v1246, 0.5
  %v1254 = vmul.f32 %v1252, 0.5
  %v1255 = vadd.f32 %v1253, 1e-05
  %v1256 = vadd.f32 %v1254, 1e-05
  %v1257 = vrsqrt.pop %v1255
  %v1258 = vrsqrt.pop %v1256
  %v1261 = vcombine.low %v1257, %v1258
  %v1263 = vunpack.c.l.s4 1966171168
  %v1264 = vunpack.c.0.s8 %v1263
  %v1265 = vlaneseq
  %v1266 = vshrl.u32 %v1265, 7
  %v1267 = vsub.s32 %v1264, %v1266
  %v1268 = vrot.slane %v1261, %v1267
  %v1270 = vunpack.c.l.s4 1966171168
  %v1271 = vunpack.c.0.s8 %v1270
  %v1272 = vlaneseq
  %v1273 = vshrl.u32 %v1272, 7
  %v1274 = vsub.s32 %v1271, %v1273
  %v1275 = vrot.slane %v1268, %v1274
  %v1277 = vmul.f32 %v1051, %v1275
  %v1279 = vlaneseq
  %v1280 = vshrl.u32 %v1279, 7
  %v1281 = vsub.s32 0, %v1280
  %v1282 = vrot.slane %v1277, %v1281
  %v1283 = vlaneseq
  %v1284 = vshrl.u32 %v1283, 7
  %v1285 = vsub.s32 1, %v1284
  %v1286 = vrot.slane %v1277, %v1285
  %v1289 = vmul.f32 %v1237, %v1282
  %v1290 = vmul.f32 %v1238, %v1286
  %v1292 = vlaneseq
  %v1293 = vshrl.u32 %v1292, 7
  %v1294 = vsub.s32 0, %v1293
  %v1295 = vrot.slane %v1053, %v1294
  %v1296 = vlaneseq
  %v1297 = vshrl.u32 %v1296, 7
  %v1298 = vsub.s32 1, %v1297
  %v1299 = vrot.slane %v1053, %v1298
  %v1302 = vadd.f32 %v1289, %v1295
  %v1303 = vadd.f32 %v1290, %v1299
  %v1304 = vmax.f32 %v1302, 0.0
  %v1305 = vmax.f32 %v1303, 0.0
  %v1306 = vsel %vm25, %v1304, 0.0
  %v1307 = vsel %vm25, %v1305, 0.0
  %v1308 = vld [vmem:[%s4] sm:$0xf]
  %v1309 = vld [vmem:[%s4 + $0x4] sm:$0xf]
  %v1310 = vld [vmem:[%s4 + $0x8] sm:$0xf]
  %v1311 = vld [vmem:[%s4 + $0xc] sm:$0xf]
  %v1312 = vld [vmem:[%s4 + $0x10] sm:$0xf]
  %v1313 = vld [vmem:[%s4 + $0x14] sm:$0xf]
  %v1314 = vld [vmem:[%s4 + $0x18] sm:$0xf]
  %v1315 = vld [vmem:[%s4 + $0x1c] sm:$0xf]
  %v1316 = vld [vmem:[%s4 + $0x20] sm:$0xf]
  %v1317 = vld [vmem:[%s4 + $0x24] sm:$0xf]
  %v1318 = vld [vmem:[%s4 + $0x28] sm:$0xf]
  %v1319 = vld [vmem:[%s4 + $0x2c] sm:$0xf]
  %v1320 = vld [vmem:[%s4 + $0x30] sm:$0xf]
  %v1321 = vld [vmem:[%s4 + $0x34] sm:$0xf]
  %v1322 = vld [vmem:[%s4 + $0x38] sm:$0xf]
  %v1323 = vld [vmem:[%s4 + $0x3c] sm:$0xf]
  %v1324 = vld [vmem:[%s4 + $0x40] sm:$0xf]
  %v1325 = vld [vmem:[%s4 + $0x44] sm:$0xf]
  %v1326 = vld [vmem:[%s4 + $0x48] sm:$0xf]
  %v1327 = vld [vmem:[%s4 + $0x4c] sm:$0xf]
  %v1328 = vld [vmem:[%s4 + $0x50] sm:$0xf]
  %v1329 = vld [vmem:[%s4 + $0x54] sm:$0xf]
  %v1330 = vld [vmem:[%s4 + $0x58] sm:$0xf]
  %v1331 = vld [vmem:[%s4 + $0x5c] sm:$0xf]
  %v1332 = vld [vmem:[%s4 + $0x60] sm:$0xf]
  %v1333 = vld [vmem:[%s4 + $0x64] sm:$0xf]
  %v1334 = vld [vmem:[%s4 + $0x68] sm:$0xf]
  %v1335 = vld [vmem:[%s4 + $0x6c] sm:$0xf]
  %v1336 = vld [vmem:[%s4 + $0x70] sm:$0xf]
  %v1337 = vld [vmem:[%s4 + $0x74] sm:$0xf]
  %v1338 = vld [vmem:[%s4 + $0x78] sm:$0xf]
  %v1339 = vld [vmem:[%s4 + $0x7c] sm:$0xf]
  %v1340 = vunpack.c.l.bf16 %v1308
  %v1341 = vunpack.c.l.bf16 %v1309
  %v1342 = vunpack.c.l.bf16 %v1310
  %v1343 = vunpack.c.l.bf16 %v1311
  %v1344 = vunpack.c.l.bf16 %v1312
  %v1345 = vunpack.c.l.bf16 %v1313
  %v1346 = vunpack.c.l.bf16 %v1314
  %v1347 = vunpack.c.l.bf16 %v1315
  %v1348 = vunpack.c.l.bf16 %v1316
  %v1349 = vunpack.c.l.bf16 %v1317
  %v1350 = vunpack.c.l.bf16 %v1318
  %v1351 = vunpack.c.l.bf16 %v1319
  %v1352 = vunpack.c.l.bf16 %v1320
  %v1353 = vunpack.c.l.bf16 %v1321
  %v1354 = vunpack.c.l.bf16 %v1322
  %v1355 = vunpack.c.l.bf16 %v1323
  %v1356 = vunpack.c.l.bf16 %v1324
  %v1357 = vunpack.c.l.bf16 %v1325
  %v1358 = vunpack.c.l.bf16 %v1326
  %v1359 = vunpack.c.l.bf16 %v1327
  %v1360 = vunpack.c.l.bf16 %v1328
  %v1361 = vunpack.c.l.bf16 %v1329
  %v1362 = vunpack.c.l.bf16 %v1330
  %v1363 = vunpack.c.l.bf16 %v1331
  %v1364 = vunpack.c.l.bf16 %v1332
  %v1365 = vunpack.c.l.bf16 %v1333
  %v1366 = vunpack.c.l.bf16 %v1334
  %v1367 = vunpack.c.l.bf16 %v1335
  %v1368 = vunpack.c.l.bf16 %v1336
  %v1369 = vunpack.c.l.bf16 %v1337
  %v1370 = vunpack.c.l.bf16 %v1338
  %v1371 = vunpack.c.l.bf16 %v1339
  %v1372 = vld [vmem:[%s5 + $0x6] ss:$0 sm:$0xff]
  %1373 = vmatprep.subr.mxu0 0.0
  %1374 = vmatpush1.msra.mxu0 %v1340
  %1375 = vmatprep.subr.mxu0 0.0
  %1376 = vmatpush1.msra.mxu0 %v1341
  %1377 = vmatprep.subr.mxu0 0.0
  %1378 = vmatpush1.msra.mxu0 %v1342
  %1379 = vmatprep.subr.mxu0 0.0
  %1380 = vmatpush1.msra.mxu0 %v1343
  %1381 = vmatprep.subr.mxu0 0.0
  %1382 = vmatpush1.msra.mxu0 %v1344
  %1383 = vmatprep.subr.mxu0 0.0
  %1384 = vmatpush1.msra.mxu0 %v1345
  %1385 = vmatprep.subr.mxu0 0.0
  %1386 = vmatpush1.msra.mxu0 %v1346
  %1387 = vmatprep.subr.mxu0 0.0
  %1388 = vmatpush1.msra.mxu0 %v1347
  %1389 = vmatprep.subr.mxu0 0.0
  %1390 = vmatpush1.msra.mxu0 %v1348
  %1391 = vmatprep.subr.mxu0 0.0
  %1392 = vmatpush1.msra.mxu0 %v1349
  %1393 = vmatprep.subr.mxu0 0.0
  %1394 = vmatpush1.msra.mxu0 %v1350
  %1395 = vmatprep.subr.mxu0 0.0
  %1396 = vmatpush1.msra.mxu0 %v1351
  %1397 = vmatprep.subr.mxu0 0.0
  %1398 = vmatpush1.msra.mxu0 %v1352
  %1399 = vmatprep.subr.mxu0 0.0
  %1400 = vmatpush1.msra.mxu0 %v1353
  %1401 = vmatprep.subr.mxu0 0.0
  %1402 = vmatpush1.msra.mxu0 %v1354
  %1403 = vmatprep.subr.mxu0 0.0
  %1404 = vmatpush1.msra.mxu0 %v1355
  %1405 = vmatprep.subr.mxu0 0.0
  %1406 = vmatpush1.msra.mxu0 %v1356
  %1407 = vmatprep.subr.mxu0 0.0
  %1408 = vmatpush1.msra.mxu0 %v1357
  %1409 = vmatprep.subr.mxu0 0.0
  %1410 = vmatpush1.msra.mxu0 %v1358
  %1411 = vmatprep.subr.mxu0 0.0
  %1412 = vmatpush1.msra.mxu0 %v1359
  %1413 = vmatprep.subr.mxu0 0.0
  %1414 = vmatpush1.msra.mxu0 %v1360
  %1415 = vmatprep.subr.mxu0 0.0
  %1416 = vmatpush1.msra.mxu0 %v1361
  %1417 = vmatprep.subr.mxu0 0.0
  %1418 = vmatpush1.msra.mxu0 %v1362
  %1419 = vmatprep.subr.mxu0 0.0
  %1420 = vmatpush1.msra.mxu0 %v1363
  %1421 = vmatprep.subr.mxu0 0.0
  %1422 = vmatpush1.msra.mxu0 %v1364
  %1423 = vmatprep.subr.mxu0 0.0
  %1424 = vmatpush1.msra.mxu0 %v1365
  %1425 = vmatprep.subr.mxu0 0.0
  %1426 = vmatpush1.msra.mxu0 %v1366
  %1427 = vmatprep.subr.mxu0 0.0
  %1428 = vmatpush1.msra.mxu0 %v1367
  %1429 = vmatprep.subr.mxu0 0.0
  %1430 = vmatpush1.msra.mxu0 %v1368
  %1431 = vmatprep.subr.mxu0 0.0
  %1432 = vmatpush1.msra.mxu0 %v1369
  %1433 = vmatprep.subr.mxu0 0.0
  %1434 = vmatpush1.msra.mxu0 %v1370
  %1435 = vmatprep.subr.mxu0 0.0
  %1436 = vmatpush1.msra.mxu0 %v1371
  %1437 = vmatprep.mubr.f32.mxu0 %v1307
  %1438 = vmatmul.mubr.f32.gmra.mrb[0].mxu0 %v1306
  %v1439 = vpop.f32.mrb[0].mxu0
  %v1440 = vadd.f32 %v1372, %v1439
  %v1441 = vpop.f32.mrb[0].mxu0
  %1442 = vdwg.mxu0
  %1443 = vst [vmem:[%s6] sm:$0xff] %v1440
  // Predicated region
  $region26: #{simple_dense_net_forward.1} parent=0 // pred_check
    _
  $region27: #{simple_dense_net_forward.1} parent=0 // pred_check_branch
    %1445 = sbr.rel (0) target = $region29
  $region28: #{simple_dense_net_forward.1} parent=0 // pred_region
    _
  $region29: #{simple_dense_net_forward.1} parent=0 // pred_fallthru
    _
  // Predicated region
  $region30: #{simple_dense_net_forward.1} parent=0 // pred_check
    _
  $region31: #{simple_dense_net_forward.1} parent=0 // pred_check_branch
    %1447 = sbr.rel (0) target = $region33
  $region32: #{simple_dense_net_forward.1} parent=0 // pred_region
    _
  $region33: #{simple_dense_net_forward.1} parent=0 // pred_fallthru
    _

</llo_original>
